<compile_context>
chip_gen: v6e
topology: v6e:2x2x1
jax: 0.10.0
libtpu: 0.0.40
codegen_flags: <defaults>
</compile_context>

<pallas_src>
import functools

import jax
import jax.numpy as jnp
from jax.experimental import pallas as pl
from jax.experimental.pallas import tpu as pltpu


def _round_up(x, m):
    return ((x + m - 1) // m) * m


def _resblock_kernel(H, W, C, Cpad, Nb, M, compute_dtype,
                     x_ref, w1_ref, b1_ref, w2_ref, b2_ref,
                     out_ref, apad_ref, pat_ref):
    L = H * W
    LP = L + 2 * M

    # lane index -> w coordinate (l = h*W + w); masks the horizontal taps that
    # would otherwise wrap into the neighbouring row after flattening (H,W)->L.
    w_idx = jax.lax.broadcasted_iota(jnp.int32, (1, L), 1) % W
    ok_left = w_idx >= 1            # tap shifted by dw = -1
    ok_right = w_idx <= W - 2       # tap shifted by dw = +1
    zero = jnp.zeros((), compute_dtype)

    # Zero only the margins (all Cpad rows) and the channel-padding rows.
    # Re-done every grid step (cheap, ~10-15% of the tap-store traffic at
    # worst) so the kernel is correct when the batch axis is sharded
    # "parallel" across TensorCores and scratch starts uninitialized.
    zmargin = jnp.zeros((Cpad, M), compute_dtype)
    for b in range(Nb):
        apad_ref[b, :, 0:M] = zmargin
        apad_ref[b, :, M + L:LP] = zmargin
    if Cpad > C:
        zrows = jnp.zeros((Cpad - C, L), compute_dtype)
        for b in range(Nb):
            apad_ref[b, C:Cpad, M:M + L] = zrows

    def conv3x3(w_ref, b_ref, get_act):
        # get_act(b): (C, L) activation of image b, already in compute_dtype.
        for b in range(Nb):
            apad_ref[b, 0:C, M:M + L] = get_act(b)      # lane-aligned interior
        # im2col: 9 shifted (Cpad, L) copies per image, written at sublane- and
        # lane-aligned offsets, so each conv is ONE (C,9*Cpad)@(9*Cpad,Nb*L)
        # MXU matmul.  Horizontal taps are lane-masked; vertical taps fall into
        # the zero margins; padded K rows are real zeros (zero weight columns).
        for dh in range(3):
            for dw in range(3):
                t = dh * 3 + dw
                start = M + (dh - 1) * W + (dw - 1)
                for b in range(Nb):
                    tap = apad_ref[b, :, start:start + L]        # (Cpad, L)
                    if dw == 0:
                        tap = jnp.where(ok_left, tap, zero)
                    elif dw == 2:
                        tap = jnp.where(ok_right, tap, zero)
                    pat_ref[t * Cpad:(t + 1) * Cpad, b * L:(b + 1) * L] = tap
        acc = jnp.dot(w_ref[...], pat_ref[...],
                      preferred_element_type=jnp.float32)        # (C, Nb*L) f32
        return acc + b_ref[...]                                  # f32 bias add

    # conv1 + inner ReLU (input read straight from the VMEM block, cast once
    # per image into the compute_dtype pad buffer).
    h1 = jnp.maximum(
        conv3x3(w1_ref, b1_ref, lambda b: x_ref[b].astype(compute_dtype)), 0.0)
    # conv2 + bias (h1 is consumed immediately by the pad writes).
    y = conv3x3(w2_ref, b2_ref,
                lambda b: h1[:, b * L:(b + 1) * L].astype(compute_dtype))
    # residual re-read from VMEM (original precision) + final ReLU; lane-dense
    # (C, L) stores per image.
    for b in range(Nb):
        out_ref[b] = jnp.maximum(
            y[:, b * L:(b + 1) * L] + x_ref[b].astype(jnp.float32),
            0.0).astype(out_ref.dtype)


def resblock_cnn(x_nchw, w1_oihw, b1, w2_oihw, b2, *,
                 compute_dtype=jnp.bfloat16, batch_block=None):
    """forward of ResBlockCNN(Conv2d(C,C,3,p=1), ReLU, Conv2d(C,C,3,p=1), act='relu').

    x_nchw: (N, C, H, W); conv weights in PyTorch OIHW layout.
    compute_dtype: dtype of the MXU matmul operands and the im2col scratch
    (bf16 recommended on v6e/v7x; pass float32 on v5e or for exact math).
    Accumulation, bias, residual and ReLU always stay f32, and the residual is
    taken from the un-quantized input.
    """
    N, C, H, W = x_nchw.shape
    L = H * W
    itemsize = jnp.dtype(compute_dtype).itemsize
    sub = 32 // itemsize                       # sublane pack: 8 (f32) / 16 (bf16)
    Cpad = _round_up(C, sub)                   # aligned per-tap K block
    M = _round_up(W + 1, 128)                  # lane-aligned flattened-pad margin
    LP = L + 2 * M
    x_item = jnp.dtype(x_nchw.dtype).itemsize

    # ---- choose images per grid step (amortize ~0.35us/step; fit VMEM) ----
    per_img = (Cpad * LP * itemsize            # flattened-pad scratch
               + 9 * Cpad * L * itemsize       # im2col patches scratch
               + 2 * 2 * C * L * x_item)       # double-buffered in + out blocks
    budget = 12 * 2 ** 20                      # conservative for v7x (64 MiB VMEM)
    if batch_block is None:
        max_nb = max(1, min(N, budget // max(per_img, 1)))
        Nb = 1
        for d in range(int(max_nb), 0, -1):
            if N % d == 0:
                Nb = d
                break
    else:
        Nb = int(batch_block)
        assert N % Nb == 0, "batch_block must divide N"

    # Layout glue:
    #   activations: NCHW -> (N, C, H*W)            free reshape, original dtype
    #   weights:     OIHW -> (O,3,3,Ipad) -> (O,9*Ipad)  zero-padded K columns
    x_flat = x_nchw.reshape(N, C, L)

    def prep_w(w):
        w = jnp.transpose(w, (0, 2, 3, 1))                         # (O, 3, 3, I)
        w = jnp.pad(w, ((0, 0), (0, 0), (0, 0), (0, Cpad - C)))    # pad K rows
        return w.reshape(C, 9 * Cpad).astype(compute_dtype)

    w1 = prep_w(w1_oihw)
    w2 = prep_w(w2_oihw)
    b1_col = b1.reshape(C, 1).astype(jnp.float32)
    b2_col = b2.reshape(C, 1).astype(jnp.float32)

    # VMEM limit derived from the actual buffers (+ headroom), capped at the
    # smallest physical VMEM of the supported parts (v7x: 64 MiB).
    vmem_need = (Nb * Cpad * LP * itemsize                 # apad scratch
                 + 9 * Cpad * Nb * L * itemsize            # patches scratch
                 + 2 * 2 * Nb * C * L * x_item             # x + out, 2-buffered
                 + 2 * 2 * C * 9 * Cpad * itemsize         # w1 + w2, 2-buffered
                 + 4 * 8 * 128 * 4)                        # biases (padded)
    vmem_limit = int(min(64 * 2 ** 20, max(2 * vmem_need + (4 << 20), 16 << 20)))

    kernel = functools.partial(_resblock_kernel, H, W, C, Cpad, Nb, M,
                               compute_dtype)

    out_flat = pl.pallas_call(
        kernel,
        out_shape=jax.ShapeDtypeStruct((N, C, L), x_nchw.dtype),
        grid_spec=pltpu.PrefetchScalarGridSpec(
            num_scalar_prefetch=0,
            grid=(N // Nb,),                                     # Nb images / step
            in_specs=[
                pl.BlockSpec((Nb, C, L), lambda n: (n, 0, 0)),   # x (lane-dense)
                pl.BlockSpec((C, 9 * Cpad), lambda n: (0, 0)),   # w1 (im2col, Kpad)
                pl.BlockSpec((C, 1), lambda n: (0, 0)),          # b1
                pl.BlockSpec((C, 9 * Cpad), lambda n: (0, 0)),   # w2 (im2col, Kpad)
                pl.BlockSpec((C, 1), lambda n: (0, 0)),          # b2
            ],
            out_specs=pl.BlockSpec((Nb, C, L), lambda n: (n, 0, 0)),
            scratch_shapes=[
                pltpu.VMEM((Nb, Cpad, LP), compute_dtype),       # flattened pad
                pltpu.VMEM((9 * Cpad, Nb * L), compute_dtype),   # im2col patches
            ],
        ),
        compiler_params=pltpu.CompilerParams(
            dimension_semantics=("parallel",),    # images independent (v7x 2 TCs)
            vmem_limit_bytes=vmem_limit,
        ),
    )(x_flat, w1, b1_col, w2, b2_col)

    return out_flat.reshape(N, C, H, W)           # free reshape back to NCHW


def _reference(x_nchw, w1, b1, w2, b2):
    """Pure-JAX reference mirroring the PyTorch forward (NCHW)."""
    dn = ('NCHW', 'OIHW', 'NCHW')
    h = jax.lax.conv_general_dilated(x_nchw, w1, (1, 1), 'SAME',
                                     dimension_numbers=dn)
    h = jax.nn.relu(h + b1.reshape(1, -1, 1, 1))
    h = jax.lax.conv_general_dilated(h, w2, (1, 1), 'SAME',
                                     dimension_numbers=dn)
    h = h + b2.reshape(1, -1, 1, 1)
    return jax.nn.relu(x_nchw + h)


if __name__ == "__main__":
    key = jax.random.PRNGKey(0)
    kx, k1, kb1, k2, kb2 = jax.random.split(key, 5)

    N, C, H, W = 2, 4, 16, 16
    x = jax.random.normal(kx, (N, C, H, W), jnp.float32)
    # deterministic synthetic parameters (Conv2d(C, C, 3) weight/bias shapes)
    w1 = jax.random.normal(k1, (C, C, 3, 3), jnp.float32) * 0.1
    b1 = jax.random.normal(kb1, (C,), jnp.float32) * 0.1
    w2 = jax.random.normal(k2, (C, C, 3, 3), jnp.float32) * 0.1
    b2 = jax.random.normal(kb2, (C,), jnp.float32) * 0.1

    ref = _reference(x, w1, b1, w2, b2)

    # exact-math path (f32 matmul operands & scratch) — tight tolerance
    out_f32 = jax.block_until_ready(
        resblock_cnn(x, w1, b1, w2, b2, compute_dtype=jnp.float32))
    assert out_f32.shape == ref.shape and out_f32.dtype == ref.dtype
    err32 = float(jnp.max(jnp.abs(out_f32 - ref)))
    assert jnp.allclose(out_f32, ref, atol=1e-4, rtol=1e-4), err32

    # fast path for v6e/v7x: bf16 matmul operands & scratch, f32 accumulation,
    # f32 residual read straight from the input block.
    out_bf16 = jax.block_until_ready(
        resblock_cnn(x, w1, b1, w2, b2, compute_dtype=jnp.bfloat16))
    err16 = float(jnp.max(jnp.abs(out_bf16 - ref)))
    assert jnp.allclose(out_bf16, ref, atol=5e-2, rtol=5e-2), err16

    print("KERNEL_OK")
</pallas_src>

<mosaic_0001>
module attributes {stable_mosaic.version = 11 : i64} {
  func.func @_resblock_kernel(%arg0: i32, %arg1: memref<2x4x256xf32, #tpu.memory_space<vmem>>, %arg2: memref<4x72xf32, #tpu.memory_space<vmem>>, %arg3: memref<4x1xf32, #tpu.memory_space<vmem>>, %arg4: memref<4x72xf32, #tpu.memory_space<vmem>>, %arg5: memref<4x1xf32, #tpu.memory_space<vmem>>, %arg6: memref<2x4x256xf32, #tpu.memory_space<vmem>>, %arg7: memref<2x8x512xf32, #tpu.memory_space<vmem>>, %arg8: memref<72x512xf32, #tpu.memory_space<vmem>>) attributes {dimension_semantics = [#tpu.dimension_semantics<parallel>], iteration_bounds = array<i64: 1>, scalar_prefetch = 0 : i64, scratch_operands = 2 : i64, tpu.core_type = #tpu.core_type<tc>, window_params = [{transform_indices = @transform_0, window_bounds = array<i64: 2, 4, 256>}, {pipeline_mode = #tpu.pipeline_mode<synchronous>, transform_indices = @transform_1, window_bounds = array<i64: 4, 72>}, {pipeline_mode = #tpu.pipeline_mode<synchronous>, transform_indices = @transform_2, window_bounds = array<i64: 4, 1>}, {pipeline_mode = #tpu.pipeline_mode<synchronous>, transform_indices = @transform_3, window_bounds = array<i64: 4, 72>}, {pipeline_mode = #tpu.pipeline_mode<synchronous>, transform_indices = @transform_4, window_bounds = array<i64: 4, 1>}, {transform_indices = @transform_5, window_bounds = array<i64: 2, 4, 256>}]} {
    %0 = tpu.iota {dimensions = array<i32: 1>} : vector<1x256xi32>
    %c16_i32 = arith.constant 16 : i32
    %c0_i32 = arith.constant 0 : i32
    %1 = arith.cmpi eq, %c16_i32, %c0_i32 : i32
    %c1_i32 = arith.constant 1 : i32
    %2 = arith.select %1, %c1_i32, %c16_i32 : i32
    %3 = vector.broadcast %2 : i32 to vector<1x256xi32>
    %4 = arith.remsi %0, %3 : vector<1x256xi32>
    %c0_i32_0 = arith.constant 0 : i32
    %5 = vector.broadcast %c0_i32_0 : i32 to vector<1x256xi32>
    %6 = arith.cmpi ne, %4, %5 : vector<1x256xi32>
    %c0_i32_1 = arith.constant 0 : i32
    %7 = vector.broadcast %c0_i32_1 : i32 to vector<1x256xi32>
    %8 = arith.cmpi slt, %4, %7 : vector<1x256xi32>
    %c0_i32_2 = arith.constant 0 : i32
    %9 = arith.cmpi slt, %2, %c0_i32_2 : i32
    %10 = vector.broadcast %9 : i1 to vector<1x256xi1>
    %11 = vector.broadcast %10 : vector<1x256xi1> to vector<1x256xi1>
    %12 = arith.xori %8, %11 : vector<1x256xi1>
    %13 = arith.andi %12, %6 : vector<1x256xi1>
    %14 = vector.broadcast %2 : i32 to vector<1x256xi32>
    %15 = arith.addi %4, %14 : vector<1x256xi32>
    %16 = arith.select %13, %15, %4 : vector<1x256xi1>, vector<1x256xi32>
    %c1_i32_3 = arith.constant 1 : i32
    %17 = vector.broadcast %c1_i32_3 : i32 to vector<1x256xi32>
    %18 = arith.cmpi sge, %16, %17 : vector<1x256xi32>
    %c14_i32 = arith.constant 14 : i32
    %19 = vector.broadcast %c14_i32 : i32 to vector<1x256xi32>
    %20 = arith.cmpi sle, %16, %19 : vector<1x256xi32>
    %cst = arith.constant 0.000000e+00 : f32
    %21 = vector.broadcast %cst : f32 to vector<8x128xf32>
    %c0 = arith.constant 0 : index
    %c0_4 = arith.constant 0 : index
    %c0_5 = arith.constant 0 : index
    %22 = vector.load %arg7[%c0, %c0_4, %c0_5] : memref<2x8x512xf32, #tpu.memory_space<vmem>>, vector<1x8x128xf32>
    %23 = vector.shape_cast %22 : vector<1x8x128xf32> to vector<8x128xf32>
    %24 = vector.shape_cast %21 : vector<8x128xf32> to vector<1x8x128xf32>
    tpu.vector_store %arg7[%c0, %c0_4, %c0_5], %24 {strides = array<i32>} : memref<2x8x512xf32, #tpu.memory_space<vmem>>, vector<1x8x128xf32>,
    %c0_6 = arith.constant 0 : index
    %c0_7 = arith.constant 0 : index
    %c384 = arith.constant 384 : index
    %25 = vector.load %arg7[%c0_6, %c0_7, %c384] : memref<2x8x512xf32, #tpu.memory_space<vmem>>, vector<1x8x128xf32>
    %26 = vector.shape_cast %25 : vector<1x8x128xf32> to vector<8x128xf32>
    %27 = vector.shape_cast %21 : vector<8x128xf32> to vector<1x8x128xf32>
    tpu.vector_store %arg7[%c0_6, %c0_7, %c384], %27 {strides = array<i32>} : memref<2x8x512xf32, #tpu.memory_space<vmem>>, vector<1x8x128xf32>,
    %c1 = arith.constant 1 : index
    %c0_8 = arith.constant 0 : index
    %c0_9 = arith.constant 0 : index
    %28 = vector.load %arg7[%c1, %c0_8, %c0_9] : memref<2x8x512xf32, #tpu.memory_space<vmem>>, vector<1x8x128xf32>
    %29 = vector.shape_cast %28 : vector<1x8x128xf32> to vector<8x128xf32>
    %30 = vector.shape_cast %21 : vector<8x128xf32> to vector<1x8x128xf32>
    tpu.vector_store %arg7[%c1, %c0_8, %c0_9], %30 {strides = array<i32>} : memref<2x8x512xf32, #tpu.memory_space<vmem>>, vector<1x8x128xf32>,
    %c1_10 = arith.constant 1 : index
    %c0_11 = arith.constant 0 : index
    %c384_12 = arith.constant 384 : index
    %31 = vector.load %arg7[%c1_10, %c0_11, %c384_12] : memref<2x8x512xf32, #tpu.memory_space<vmem>>, vector<1x8x128xf32>
    %32 = vector.shape_cast %31 : vector<1x8x128xf32> to vector<8x128xf32>
    %33 = vector.shape_cast %21 : vector<8x128xf32> to vector<1x8x128xf32>
    tpu.vector_store %arg7[%c1_10, %c0_11, %c384_12], %33 {strides = array<i32>} : memref<2x8x512xf32, #tpu.memory_space<vmem>>, vector<1x8x128xf32>,
    %cst_13 = arith.constant 0.000000e+00 : f32
    %34 = vector.broadcast %cst_13 : f32 to vector<4x256xf32>
    %c0_14 = arith.constant 0 : index
    %c4 = arith.constant 4 : index
    %c128 = arith.constant 128 : index
    %35 = vector.load %arg7[%c0_14, %c4, %c128] : memref<2x8x512xf32, #tpu.memory_space<vmem>>, vector<1x4x256xf32>
    %36 = vector.shape_cast %35 : vector<1x4x256xf32> to vector<4x256xf32>
    %37 = vector.shape_cast %34 : vector<4x256xf32> to vector<1x4x256xf32>
    tpu.vector_store %arg7[%c0_14, %c4, %c128], %37 {strides = array<i32>} : memref<2x8x512xf32, #tpu.memory_space<vmem>>, vector<1x4x256xf32>,
    %c1_15 = arith.constant 1 : index
    %c4_16 = arith.constant 4 : index
    %c128_17 = arith.constant 128 : index
    %38 = vector.load %arg7[%c1_15, %c4_16, %c128_17] : memref<2x8x512xf32, #tpu.memory_space<vmem>>, vector<1x4x256xf32>
    %39 = vector.shape_cast %38 : vector<1x4x256xf32> to vector<4x256xf32>
    %40 = vector.shape_cast %34 : vector<4x256xf32> to vector<1x4x256xf32>
    tpu.vector_store %arg7[%c1_15, %c4_16, %c128_17], %40 {strides = array<i32>} : memref<2x8x512xf32, #tpu.memory_space<vmem>>, vector<1x4x256xf32>,
    %c0_18 = arith.constant 0 : index
    %c0_19 = arith.constant 0 : index
    %c0_20 = arith.constant 0 : index
    %41 = vector.load %arg1[%c0_18, %c0_19, %c0_20] : memref<2x4x256xf32, #tpu.memory_space<vmem>>, vector<1x4x256xf32>
    %42 = vector.shape_cast %41 : vector<1x4x256xf32> to vector<4x256xf32>
    %c0_21 = arith.constant 0 : index
    %c0_22 = arith.constant 0 : index
    %c128_23 = arith.constant 128 : index
    %43 = vector.load %arg7[%c0_21, %c0_22, %c128_23] : memref<2x8x512xf32, #tpu.memory_space<vmem>>, vector<1x4x256xf32>
    %44 = vector.shape_cast %43 : vector<1x4x256xf32> to vector<4x256xf32>
    %45 = vector.shape_cast %42 : vector<4x256xf32> to vector<1x4x256xf32>
    tpu.vector_store %arg7[%c0_21, %c0_22, %c128_23], %45 {strides = array<i32>} : memref<2x8x512xf32, #tpu.memory_space<vmem>>, vector<1x4x256xf32>,
    %c1_24 = arith.constant 1 : index
    %c0_25 = arith.constant 0 : index
    %c0_26 = arith.constant 0 : index
    %46 = vector.load %arg1[%c1_24, %c0_25, %c0_26] : memref<2x4x256xf32, #tpu.memory_space<vmem>>, vector<1x4x256xf32>
    %47 = vector.shape_cast %46 : vector<1x4x256xf32> to vector<4x256xf32>
    %c1_27 = arith.constant 1 : index
    %c0_28 = arith.constant 0 : index
    %c128_29 = arith.constant 128 : index
    %48 = vector.load %arg7[%c1_27, %c0_28, %c128_29] : memref<2x8x512xf32, #tpu.memory_space<vmem>>, vector<1x4x256xf32>
    %49 = vector.shape_cast %48 : vector<1x4x256xf32> to vector<4x256xf32>
    %50 = vector.shape_cast %47 : vector<4x256xf32> to vector<1x4x256xf32>
    tpu.vector_store %arg7[%c1_27, %c0_28, %c128_29], %50 {strides = array<i32>} : memref<2x8x512xf32, #tpu.memory_space<vmem>>, vector<1x4x256xf32>,
    %c0_30 = arith.constant 0 : index
    %c0_31 = arith.constant 0 : index
    %c111 = arith.constant 111 : index
    %51 = vector.load %arg7[%c0_30, %c0_31, %c111] : memref<2x8x512xf32, #tpu.memory_space<vmem>>, vector<1x8x256xf32>
    %52 = vector.shape_cast %51 : vector<1x8x256xf32> to vector<8x256xf32>
    %cst_32 = arith.constant 0.000000e+00 : f32
    %53 = vector.shape_cast %18 : vector<1x256xi1> to vector<1x256xi1>
    %54 = vector.broadcast %53 : vector<1x256xi1> to vector<8x256xi1>
    %55 = vector.broadcast %cst_32 : f32 to vector<8x256xf32>
    %56 = arith.select %54, %52, %55 : vector<8x256xi1>, vector<8x256xf32>
    %c0_33 = arith.constant 0 : index
    %c0_34 = arith.constant 0 : index
    %57 = vector.load %arg8[%c0_33, %c0_34] : memref<72x512xf32, #tpu.memory_space<vmem>>, vector<8x256xf32>
    tpu.vector_store %arg8[%c0_33, %c0_34], %56 {strides = array<i32>} : memref<72x512xf32, #tpu.memory_space<vmem>>, vector<8x256xf32>,
    %c1_35 = arith.constant 1 : index
    %c0_36 = arith.constant 0 : index
    %c111_37 = arith.constant 111 : index
    %58 = vector.load %arg7[%c1_35, %c0_36, %c111_37] : memref<2x8x512xf32, #tpu.memory_space<vmem>>, vector<1x8x256xf32>
    %59 = vector.shape_cast %58 : vector<1x8x256xf32> to vector<8x256xf32>
    %cst_38 = arith.constant 0.000000e+00 : f32
    %60 = vector.shape_cast %18 : vector<1x256xi1> to vector<1x256xi1>
    %61 = vector.broadcast %60 : vector<1x256xi1> to vector<8x256xi1>
    %62 = vector.broadcast %cst_38 : f32 to vector<8x256xf32>
    %63 = arith.select %61, %59, %62 : vector<8x256xi1>, vector<8x256xf32>
    %c0_39 = arith.constant 0 : index
    %c256 = arith.constant 256 : index
    %64 = vector.load %arg8[%c0_39, %c256] : memref<72x512xf32, #tpu.memory_space<vmem>>, vector<8x256xf32>
    tpu.vector_store %arg8[%c0_39, %c256], %63 {strides = array<i32>} : memref<72x512xf32, #tpu.memory_space<vmem>>, vector<8x256xf32>,
    %c0_40 = arith.constant 0 : index
    %c0_41 = arith.constant 0 : index
    %c112 = arith.constant 112 : index
    %65 = vector.load %arg7[%c0_40, %c0_41, %c112] : memref<2x8x512xf32, #tpu.memory_space<vmem>>, vector<1x8x256xf32>
    %66 = vector.shape_cast %65 : vector<1x8x256xf32> to vector<8x256xf32>
    %c8 = arith.constant 8 : index
    %c0_42 = arith.constant 0 : index
    %67 = vector.load %arg8[%c8, %c0_42] : memref<72x512xf32, #tpu.memory_space<vmem>>, vector<8x256xf32>
    tpu.vector_store %arg8[%c8, %c0_42], %66 {strides = array<i32>} : memref<72x512xf32, #tpu.memory_space<vmem>>, vector<8x256xf32>,
    %c1_43 = arith.constant 1 : index
    %c0_44 = arith.constant 0 : index
    %c112_45 = arith.constant 112 : index
    %68 = vector.load %arg7[%c1_43, %c0_44, %c112_45] : memref<2x8x512xf32, #tpu.memory_space<vmem>>, vector<1x8x256xf32>
    %69 = vector.shape_cast %68 : vector<1x8x256xf32> to vector<8x256xf32>
    %c8_46 = arith.constant 8 : index
    %c256_47 = arith.constant 256 : index
    %70 = vector.load %arg8[%c8_46, %c256_47] : memref<72x512xf32, #tpu.memory_space<vmem>>, vector<8x256xf32>
    tpu.vector_store %arg8[%c8_46, %c256_47], %69 {strides = array<i32>} : memref<72x512xf32, #tpu.memory_space<vmem>>, vector<8x256xf32>,
    %c0_48 = arith.constant 0 : index
    %c0_49 = arith.constant 0 : index
    %c113 = arith.constant 113 : index
    %71 = vector.load %arg7[%c0_48, %c0_49, %c113] : memref<2x8x512xf32, #tpu.memory_space<vmem>>, vector<1x8x256xf32>
    %72 = vector.shape_cast %71 : vector<1x8x256xf32> to vector<8x256xf32>
    %cst_50 = arith.constant 0.000000e+00 : f32
    %73 = vector.shape_cast %20 : vector<1x256xi1> to vector<1x256xi1>
    %74 = vector.broadcast %73 : vector<1x256xi1> to vector<8x256xi1>
    %75 = vector.broadcast %cst_50 : f32 to vector<8x256xf32>
    %76 = arith.select %74, %72, %75 : vector<8x256xi1>, vector<8x256xf32>
    %c16 = arith.constant 16 : index
    %c0_51 = arith.constant 0 : index
    %77 = vector.load %arg8[%c16, %c0_51] : memref<72x512xf32, #tpu.memory_space<vmem>>, vector<8x256xf32>
    tpu.vector_store %arg8[%c16, %c0_51], %76 {strides = array<i32>} : memref<72x512xf32, #tpu.memory_space<vmem>>, vector<8x256xf32>,
    %c1_52 = arith.constant 1 : index
    %c0_53 = arith.constant 0 : index
    %c113_54 = arith.constant 113 : index
    %78 = vector.load %arg7[%c1_52, %c0_53, %c113_54] : memref<2x8x512xf32, #tpu.memory_space<vmem>>, vector<1x8x256xf32>
    %79 = vector.shape_cast %78 : vector<1x8x256xf32> to vector<8x256xf32>
    %cst_55 = arith.constant 0.000000e+00 : f32
    %80 = vector.shape_cast %20 : vector<1x256xi1> to vector<1x256xi1>
    %81 = vector.broadcast %80 : vector<1x256xi1> to vector<8x256xi1>
    %82 = vector.broadcast %cst_55 : f32 to vector<8x256xf32>
    %83 = arith.select %81, %79, %82 : vector<8x256xi1>, vector<8x256xf32>
    %c16_56 = arith.constant 16 : index
    %c256_57 = arith.constant 256 : index
    %84 = vector.load %arg8[%c16_56, %c256_57] : memref<72x512xf32, #tpu.memory_space<vmem>>, vector<8x256xf32>
    tpu.vector_store %arg8[%c16_56, %c256_57], %83 {strides = array<i32>} : memref<72x512xf32, #tpu.memory_space<vmem>>, vector<8x256xf32>,
    %c0_58 = arith.constant 0 : index
    %c0_59 = arith.constant 0 : index
    %c127 = arith.constant 127 : index
    %85 = vector.load %arg7[%c0_58, %c0_59, %c127] : memref<2x8x512xf32, #tpu.memory_space<vmem>>, vector<1x8x256xf32>
    %86 = vector.shape_cast %85 : vector<1x8x256xf32> to vector<8x256xf32>
    %cst_60 = arith.constant 0.000000e+00 : f32
    %87 = vector.shape_cast %18 : vector<1x256xi1> to vector<1x256xi1>
    %88 = vector.broadcast %87 : vector<1x256xi1> to vector<8x256xi1>
    %89 = vector.broadcast %cst_60 : f32 to vector<8x256xf32>
    %90 = arith.select %88, %86, %89 : vector<8x256xi1>, vector<8x256xf32>
    %c24 = arith.constant 24 : index
    %c0_61 = arith.constant 0 : index
    %91 = vector.load %arg8[%c24, %c0_61] : memref<72x512xf32, #tpu.memory_space<vmem>>, vector<8x256xf32>
    tpu.vector_store %arg8[%c24, %c0_61], %90 {strides = array<i32>} : memref<72x512xf32, #tpu.memory_space<vmem>>, vector<8x256xf32>,
    %c1_62 = arith.constant 1 : index
    %c0_63 = arith.constant 0 : index
    %c127_64 = arith.constant 127 : index
    %92 = vector.load %arg7[%c1_62, %c0_63, %c127_64] : memref<2x8x512xf32, #tpu.memory_space<vmem>>, vector<1x8x256xf32>
    %93 = vector.shape_cast %92 : vector<1x8x256xf32> to vector<8x256xf32>
    %cst_65 = arith.constant 0.000000e+00 : f32
    %94 = vector.shape_cast %18 : vector<1x256xi1> to vector<1x256xi1>
    %95 = vector.broadcast %94 : vector<1x256xi1> to vector<8x256xi1>
    %96 = vector.broadcast %cst_65 : f32 to vector<8x256xf32>
    %97 = arith.select %95, %93, %96 : vector<8x256xi1>, vector<8x256xf32>
    %c24_66 = arith.constant 24 : index
    %c256_67 = arith.constant 256 : index
    %98 = vector.load %arg8[%c24_66, %c256_67] : memref<72x512xf32, #tpu.memory_space<vmem>>, vector<8x256xf32>
    tpu.vector_store %arg8[%c24_66, %c256_67], %97 {strides = array<i32>} : memref<72x512xf32, #tpu.memory_space<vmem>>, vector<8x256xf32>,
    %c0_68 = arith.constant 0 : index
    %c0_69 = arith.constant 0 : index
    %c128_70 = arith.constant 128 : index
    %99 = vector.load %arg7[%c0_68, %c0_69, %c128_70] : memref<2x8x512xf32, #tpu.memory_space<vmem>>, vector<1x8x256xf32>
    %100 = vector.shape_cast %99 : vector<1x8x256xf32> to vector<8x256xf32>
    %c32 = arith.constant 32 : index
    %c0_71 = arith.constant 0 : index
    %101 = vector.load %arg8[%c32, %c0_71] : memref<72x512xf32, #tpu.memory_space<vmem>>, vector<8x256xf32>
    tpu.vector_store %arg8[%c32, %c0_71], %100 {strides = array<i32>} : memref<72x512xf32, #tpu.memory_space<vmem>>, vector<8x256xf32>,
    %c1_72 = arith.constant 1 : index
    %c0_73 = arith.constant 0 : index
    %c128_74 = arith.constant 128 : index
    %102 = vector.load %arg7[%c1_72, %c0_73, %c128_74] : memref<2x8x512xf32, #tpu.memory_space<vmem>>, vector<1x8x256xf32>
    %103 = vector.shape_cast %102 : vector<1x8x256xf32> to vector<8x256xf32>
    %c32_75 = arith.constant 32 : index
    %c256_76 = arith.constant 256 : index
    %104 = vector.load %arg8[%c32_75, %c256_76] : memref<72x512xf32, #tpu.memory_space<vmem>>, vector<8x256xf32>
    tpu.vector_store %arg8[%c32_75, %c256_76], %103 {strides = array<i32>} : memref<72x512xf32, #tpu.memory_space<vmem>>, vector<8x256xf32>,
    %c0_77 = arith.constant 0 : index
    %c0_78 = arith.constant 0 : index
    %c129 = arith.constant 129 : index
    %105 = vector.load %arg7[%c0_77, %c0_78, %c129] : memref<2x8x512xf32, #tpu.memory_space<vmem>>, vector<1x8x256xf32>
    %106 = vector.shape_cast %105 : vector<1x8x256xf32> to vector<8x256xf32>
    %cst_79 = arith.constant 0.000000e+00 : f32
    %107 = vector.shape_cast %20 : vector<1x256xi1> to vector<1x256xi1>
    %108 = vector.broadcast %107 : vector<1x256xi1> to vector<8x256xi1>
    %109 = vector.broadcast %cst_79 : f32 to vector<8x256xf32>
    %110 = arith.select %108, %106, %109 : vector<8x256xi1>, vector<8x256xf32>
    %c40 = arith.constant 40 : index
    %c0_80 = arith.constant 0 : index
    %111 = vector.load %arg8[%c40, %c0_80] : memref<72x512xf32, #tpu.memory_space<vmem>>, vector<8x256xf32>
    tpu.vector_store %arg8[%c40, %c0_80], %110 {strides = array<i32>} : memref<72x512xf32, #tpu.memory_space<vmem>>, vector<8x256xf32>,
    %c1_81 = arith.constant 1 : index
    %c0_82 = arith.constant 0 : index
    %c129_83 = arith.constant 129 : index
    %112 = vector.load %arg7[%c1_81, %c0_82, %c129_83] : memref<2x8x512xf32, #tpu.memory_space<vmem>>, vector<1x8x256xf32>
    %113 = vector.shape_cast %112 : vector<1x8x256xf32> to vector<8x256xf32>
    %cst_84 = arith.constant 0.000000e+00 : f32
    %114 = vector.shape_cast %20 : vector<1x256xi1> to vector<1x256xi1>
    %115 = vector.broadcast %114 : vector<1x256xi1> to vector<8x256xi1>
    %116 = vector.broadcast %cst_84 : f32 to vector<8x256xf32>
    %117 = arith.select %115, %113, %116 : vector<8x256xi1>, vector<8x256xf32>
    %c40_85 = arith.constant 40 : index
    %c256_86 = arith.constant 256 : index
    %118 = vector.load %arg8[%c40_85, %c256_86] : memref<72x512xf32, #tpu.memory_space<vmem>>, vector<8x256xf32>
    tpu.vector_store %arg8[%c40_85, %c256_86], %117 {strides = array<i32>} : memref<72x512xf32, #tpu.memory_space<vmem>>, vector<8x256xf32>,
    %c0_87 = arith.constant 0 : index
    %c0_88 = arith.constant 0 : index
    %c143 = arith.constant 143 : index
    %119 = vector.load %arg7[%c0_87, %c0_88, %c143] : memref<2x8x512xf32, #tpu.memory_space<vmem>>, vector<1x8x256xf32>
    %120 = vector.shape_cast %119 : vector<1x8x256xf32> to vector<8x256xf32>
    %cst_89 = arith.constant 0.000000e+00 : f32
    %121 = vector.shape_cast %18 : vector<1x256xi1> to vector<1x256xi1>
    %122 = vector.broadcast %121 : vector<1x256xi1> to vector<8x256xi1>
    %123 = vector.broadcast %cst_89 : f32 to vector<8x256xf32>
    %124 = arith.select %122, %120, %123 : vector<8x256xi1>, vector<8x256xf32>
    %c48 = arith.constant 48 : index
    %c0_90 = arith.constant 0 : index
    %125 = vector.load %arg8[%c48, %c0_90] : memref<72x512xf32, #tpu.memory_space<vmem>>, vector<8x256xf32>
    tpu.vector_store %arg8[%c48, %c0_90], %124 {strides = array<i32>} : memref<72x512xf32, #tpu.memory_space<vmem>>, vector<8x256xf32>,
    %c1_91 = arith.constant 1 : index
    %c0_92 = arith.constant 0 : index
    %c143_93 = arith.constant 143 : index
    %126 = vector.load %arg7[%c1_91, %c0_92, %c143_93] : memref<2x8x512xf32, #tpu.memory_space<vmem>>, vector<1x8x256xf32>
    %127 = vector.shape_cast %126 : vector<1x8x256xf32> to vector<8x256xf32>
    %cst_94 = arith.constant 0.000000e+00 : f32
    %128 = vector.shape_cast %18 : vector<1x256xi1> to vector<1x256xi1>
    %129 = vector.broadcast %128 : vector<1x256xi1> to vector<8x256xi1>
    %130 = vector.broadcast %cst_94 : f32 to vector<8x256xf32>
    %131 = arith.select %129, %127, %130 : vector<8x256xi1>, vector<8x256xf32>
    %c48_95 = arith.constant 48 : index
    %c256_96 = arith.constant 256 : index
    %132 = vector.load %arg8[%c48_95, %c256_96] : memref<72x512xf32, #tpu.memory_space<vmem>>, vector<8x256xf32>
    tpu.vector_store %arg8[%c48_95, %c256_96], %131 {strides = array<i32>} : memref<72x512xf32, #tpu.memory_space<vmem>>, vector<8x256xf32>,
    %c0_97 = arith.constant 0 : index
    %c0_98 = arith.constant 0 : index
    %c144 = arith.constant 144 : index
    %133 = vector.load %arg7[%c0_97, %c0_98, %c144] : memref<2x8x512xf32, #tpu.memory_space<vmem>>, vector<1x8x256xf32>
    %134 = vector.shape_cast %133 : vector<1x8x256xf32> to vector<8x256xf32>
    %c56 = arith.constant 56 : index
    %c0_99 = arith.constant 0 : index
    %135 = vector.load %arg8[%c56, %c0_99] : memref<72x512xf32, #tpu.memory_space<vmem>>, vector<8x256xf32>
    tpu.vector_store %arg8[%c56, %c0_99], %134 {strides = array<i32>} : memref<72x512xf32, #tpu.memory_space<vmem>>, vector<8x256xf32>,
    %c1_100 = arith.constant 1 : index
    %c0_101 = arith.constant 0 : index
    %c144_102 = arith.constant 144 : index
    %136 = vector.load %arg7[%c1_100, %c0_101, %c144_102] : memref<2x8x512xf32, #tpu.memory_space<vmem>>, vector<1x8x256xf32>
    %137 = vector.shape_cast %136 : vector<1x8x256xf32> to vector<8x256xf32>
    %c56_103 = arith.constant 56 : index
    %c256_104 = arith.constant 256 : index
    %138 = vector.load %arg8[%c56_103, %c256_104] : memref<72x512xf32, #tpu.memory_space<vmem>>, vector<8x256xf32>
    tpu.vector_store %arg8[%c56_103, %c256_104], %137 {strides = array<i32>} : memref<72x512xf32, #tpu.memory_space<vmem>>, vector<8x256xf32>,
    %c0_105 = arith.constant 0 : index
    %c0_106 = arith.constant 0 : index
    %c145 = arith.constant 145 : index
    %139 = vector.load %arg7[%c0_105, %c0_106, %c145] : memref<2x8x512xf32, #tpu.memory_space<vmem>>, vector<1x8x256xf32>
    %140 = vector.shape_cast %139 : vector<1x8x256xf32> to vector<8x256xf32>
    %cst_107 = arith.constant 0.000000e+00 : f32
    %141 = vector.shape_cast %20 : vector<1x256xi1> to vector<1x256xi1>
    %142 = vector.broadcast %141 : vector<1x256xi1> to vector<8x256xi1>
    %143 = vector.broadcast %cst_107 : f32 to vector<8x256xf32>
    %144 = arith.select %142, %140, %143 : vector<8x256xi1>, vector<8x256xf32>
    %c64 = arith.constant 64 : index
    %c0_108 = arith.constant 0 : index
    %145 = vector.load %arg8[%c64, %c0_108] : memref<72x512xf32, #tpu.memory_space<vmem>>, vector<8x256xf32>
    tpu.vector_store %arg8[%c64, %c0_108], %144 {strides = array<i32>} : memref<72x512xf32, #tpu.memory_space<vmem>>, vector<8x256xf32>,
    %c1_109 = arith.constant 1 : index
    %c0_110 = arith.constant 0 : index
    %c145_111 = arith.constant 145 : index
    %146 = vector.load %arg7[%c1_109, %c0_110, %c145_111] : memref<2x8x512xf32, #tpu.memory_space<vmem>>, vector<1x8x256xf32>
    %147 = vector.shape_cast %146 : vector<1x8x256xf32> to vector<8x256xf32>
    %cst_112 = arith.constant 0.000000e+00 : f32
    %148 = vector.shape_cast %20 : vector<1x256xi1> to vector<1x256xi1>
    %149 = vector.broadcast %148 : vector<1x256xi1> to vector<8x256xi1>
    %150 = vector.broadcast %cst_112 : f32 to vector<8x256xf32>
    %151 = arith.select %149, %147, %150 : vector<8x256xi1>, vector<8x256xf32>
    %c64_113 = arith.constant 64 : index
    %c256_114 = arith.constant 256 : index
    %152 = vector.load %arg8[%c64_113, %c256_114] : memref<72x512xf32, #tpu.memory_space<vmem>>, vector<8x256xf32>
    tpu.vector_store %arg8[%c64_113, %c256_114], %151 {strides = array<i32>} : memref<72x512xf32, #tpu.memory_space<vmem>>, vector<8x256xf32>,
    %c0_115 = arith.constant 0 : index
    %c0_116 = arith.constant 0 : index
    %153 = vector.load %arg2[%c0_115, %c0_116] : memref<4x72xf32, #tpu.memory_space<vmem>>, vector<4x72xf32>
    %c0_117 = arith.constant 0 : index
    %c0_118 = arith.constant 0 : index
    %154 = vector.load %arg8[%c0_117, %c0_118] : memref<72x512xf32, #tpu.memory_space<vmem>>, vector<72x512xf32>
    %cst_119 = arith.constant dense<0.000000e+00> : vector<4x512xf32>
    %155 = tpu.matmul %153, %154, %cst_119 {dimension_numbers = #tpu.dot_dimension_numbers<[1], [0], [0], [1], [0, 0, 1, 1], [], []>} : vector<4x72xf32>, vector<72x512xf32>, vector<4x512xf32> -> vector<4x512xf32>
    %c0_120 = arith.constant 0 : index
    %c0_121 = arith.constant 0 : index
    %156 = vector.load %arg3[%c0_120, %c0_121] : memref<4x1xf32, #tpu.memory_space<vmem>>, vector<4x1xf32>
    %157 = vector.broadcast %156 : vector<4x1xf32> to vector<4x512xf32>
    %158 = arith.addf %155, %157 : vector<4x512xf32>
    %cst_122 = arith.constant 0.000000e+00 : f32
    %159 = vector.broadcast %cst_122 : f32 to vector<4x512xf32>
    %160 = arith.maximumf %158, %159 : vector<4x512xf32>
    %161 = vector.extract_strided_slice %160 {offsets = [0, 0], sizes = [4, 256], strides = [1, 1]} : vector<4x512xf32> to vector<4x256xf32>
    %c0_123 = arith.constant 0 : index
    %c0_124 = arith.constant 0 : index
    %c128_125 = arith.constant 128 : index
    %162 = vector.load %arg7[%c0_123, %c0_124, %c128_125] : memref<2x8x512xf32, #tpu.memory_space<vmem>>, vector<1x4x256xf32>
    %163 = vector.shape_cast %162 : vector<1x4x256xf32> to vector<4x256xf32>
    %164 = vector.shape_cast %161 : vector<4x256xf32> to vector<1x4x256xf32>
    tpu.vector_store %arg7[%c0_123, %c0_124, %c128_125], %164 {strides = array<i32>} : memref<2x8x512xf32, #tpu.memory_space<vmem>>, vector<1x4x256xf32>,
    %165 = vector.extract_strided_slice %160 {offsets = [0, 256], sizes = [4, 256], strides = [1, 1]} : vector<4x512xf32> to vector<4x256xf32>
    %c1_126 = arith.constant 1 : index
    %c0_127 = arith.constant 0 : index
    %c128_128 = arith.constant 128 : index
    %166 = vector.load %arg7[%c1_126, %c0_127, %c128_128] : memref<2x8x512xf32, #tpu.memory_space<vmem>>, vector<1x4x256xf32>
    %167 = vector.shape_cast %166 : vector<1x4x256xf32> to vector<4x256xf32>
    %168 = vector.shape_cast %165 : vector<4x256xf32> to vector<1x4x256xf32>
    tpu.vector_store %arg7[%c1_126, %c0_127, %c128_128], %168 {strides = array<i32>} : memref<2x8x512xf32, #tpu.memory_space<vmem>>, vector<1x4x256xf32>,
    %c0_129 = arith.constant 0 : index
    %c0_130 = arith.constant 0 : index
    %c111_131 = arith.constant 111 : index
    %169 = vector.load %arg7[%c0_129, %c0_130, %c111_131] : memref<2x8x512xf32, #tpu.memory_space<vmem>>, vector<1x8x256xf32>
    %170 = vector.shape_cast %169 : vector<1x8x256xf32> to vector<8x256xf32>
    %cst_132 = arith.constant 0.000000e+00 : f32
    %171 = vector.shape_cast %18 : vector<1x256xi1> to vector<1x256xi1>
    %172 = vector.broadcast %171 : vector<1x256xi1> to vector<8x256xi1>
    %173 = vector.broadcast %cst_132 : f32 to vector<8x256xf32>
    %174 = arith.select %172, %170, %173 : vector<8x256xi1>, vector<8x256xf32>
    %c0_133 = arith.constant 0 : index
    %c0_134 = arith.constant 0 : index
    %175 = vector.load %arg8[%c0_133, %c0_134] : memref<72x512xf32, #tpu.memory_space<vmem>>, vector<8x256xf32>
    tpu.vector_store %arg8[%c0_133, %c0_134], %174 {strides = array<i32>} : memref<72x512xf32, #tpu.memory_space<vmem>>, vector<8x256xf32>,
    %c1_135 = arith.constant 1 : index
    %c0_136 = arith.constant 0 : index
    %c111_137 = arith.constant 111 : index
    %176 = vector.load %arg7[%c1_135, %c0_136, %c111_137] : memref<2x8x512xf32, #tpu.memory_space<vmem>>, vector<1x8x256xf32>
    %177 = vector.shape_cast %176 : vector<1x8x256xf32> to vector<8x256xf32>
    %cst_138 = arith.constant 0.000000e+00 : f32
    %178 = vector.shape_cast %18 : vector<1x256xi1> to vector<1x256xi1>
    %179 = vector.broadcast %178 : vector<1x256xi1> to vector<8x256xi1>
    %180 = vector.broadcast %cst_138 : f32 to vector<8x256xf32>
    %181 = arith.select %179, %177, %180 : vector<8x256xi1>, vector<8x256xf32>
    %c0_139 = arith.constant 0 : index
    %c256_140 = arith.constant 256 : index
    %182 = vector.load %arg8[%c0_139, %c256_140] : memref<72x512xf32, #tpu.memory_space<vmem>>, vector<8x256xf32>
    tpu.vector_store %arg8[%c0_139, %c256_140], %181 {strides = array<i32>} : memref<72x512xf32, #tpu.memory_space<vmem>>, vector<8x256xf32>,
    %c0_141 = arith.constant 0 : index
    %c0_142 = arith.constant 0 : index
    %c112_143 = arith.constant 112 : index
    %183 = vector.load %arg7[%c0_141, %c0_142, %c112_143] : memref<2x8x512xf32, #tpu.memory_space<vmem>>, vector<1x8x256xf32>
    %184 = vector.shape_cast %183 : vector<1x8x256xf32> to vector<8x256xf32>
    %c8_144 = arith.constant 8 : index
    %c0_145 = arith.constant 0 : index
    %185 = vector.load %arg8[%c8_144, %c0_145] : memref<72x512xf32, #tpu.memory_space<vmem>>, vector<8x256xf32>
    tpu.vector_store %arg8[%c8_144, %c0_145], %184 {strides = array<i32>} : memref<72x512xf32, #tpu.memory_space<vmem>>, vector<8x256xf32>,
    %c1_146 = arith.constant 1 : index
    %c0_147 = arith.constant 0 : index
    %c112_148 = arith.constant 112 : index
    %186 = vector.load %arg7[%c1_146, %c0_147, %c112_148] : memref<2x8x512xf32, #tpu.memory_space<vmem>>, vector<1x8x256xf32>
    %187 = vector.shape_cast %186 : vector<1x8x256xf32> to vector<8x256xf32>
    %c8_149 = arith.constant 8 : index
    %c256_150 = arith.constant 256 : index
    %188 = vector.load %arg8[%c8_149, %c256_150] : memref<72x512xf32, #tpu.memory_space<vmem>>, vector<8x256xf32>
    tpu.vector_store %arg8[%c8_149, %c256_150], %187 {strides = array<i32>} : memref<72x512xf32, #tpu.memory_space<vmem>>, vector<8x256xf32>,
    %c0_151 = arith.constant 0 : index
    %c0_152 = arith.constant 0 : index
    %c113_153 = arith.constant 113 : index
    %189 = vector.load %arg7[%c0_151, %c0_152, %c113_153] : memref<2x8x512xf32, #tpu.memory_space<vmem>>, vector<1x8x256xf32>
    %190 = vector.shape_cast %189 : vector<1x8x256xf32> to vector<8x256xf32>
    %cst_154 = arith.constant 0.000000e+00 : f32
    %191 = vector.shape_cast %20 : vector<1x256xi1> to vector<1x256xi1>
    %192 = vector.broadcast %191 : vector<1x256xi1> to vector<8x256xi1>
    %193 = vector.broadcast %cst_154 : f32 to vector<8x256xf32>
    %194 = arith.select %192, %190, %193 : vector<8x256xi1>, vector<8x256xf32>
    %c16_155 = arith.constant 16 : index
    %c0_156 = arith.constant 0 : index
    %195 = vector.load %arg8[%c16_155, %c0_156] : memref<72x512xf32, #tpu.memory_space<vmem>>, vector<8x256xf32>
    tpu.vector_store %arg8[%c16_155, %c0_156], %194 {strides = array<i32>} : memref<72x512xf32, #tpu.memory_space<vmem>>, vector<8x256xf32>,
    %c1_157 = arith.constant 1 : index
    %c0_158 = arith.constant 0 : index
    %c113_159 = arith.constant 113 : index
    %196 = vector.load %arg7[%c1_157, %c0_158, %c113_159] : memref<2x8x512xf32, #tpu.memory_space<vmem>>, vector<1x8x256xf32>
    %197 = vector.shape_cast %196 : vector<1x8x256xf32> to vector<8x256xf32>
    %cst_160 = arith.constant 0.000000e+00 : f32
    %198 = vector.shape_cast %20 : vector<1x256xi1> to vector<1x256xi1>
    %199 = vector.broadcast %198 : vector<1x256xi1> to vector<8x256xi1>
    %200 = vector.broadcast %cst_160 : f32 to vector<8x256xf32>
    %201 = arith.select %199, %197, %200 : vector<8x256xi1>, vector<8x256xf32>
    %c16_161 = arith.constant 16 : index
    %c256_162 = arith.constant 256 : index
    %202 = vector.load %arg8[%c16_161, %c256_162] : memref<72x512xf32, #tpu.memory_space<vmem>>, vector<8x256xf32>
    tpu.vector_store %arg8[%c16_161, %c256_162], %201 {strides = array<i32>} : memref<72x512xf32, #tpu.memory_space<vmem>>, vector<8x256xf32>,
    %c0_163 = arith.constant 0 : index
    %c0_164 = arith.constant 0 : index
    %c127_165 = arith.constant 127 : index
    %203 = vector.load %arg7[%c0_163, %c0_164, %c127_165] : memref<2x8x512xf32, #tpu.memory_space<vmem>>, vector<1x8x256xf32>
    %204 = vector.shape_cast %203 : vector<1x8x256xf32> to vector<8x256xf32>
    %cst_166 = arith.constant 0.000000e+00 : f32
    %205 = vector.shape_cast %18 : vector<1x256xi1> to vector<1x256xi1>
    %206 = vector.broadcast %205 : vector<1x256xi1> to vector<8x256xi1>
    %207 = vector.broadcast %cst_166 : f32 to vector<8x256xf32>
    %208 = arith.select %206, %204, %207 : vector<8x256xi1>, vector<8x256xf32>
    %c24_167 = arith.constant 24 : index
    %c0_168 = arith.constant 0 : index
    %209 = vector.load %arg8[%c24_167, %c0_168] : memref<72x512xf32, #tpu.memory_space<vmem>>, vector<8x256xf32>
    tpu.vector_store %arg8[%c24_167, %c0_168], %208 {strides = array<i32>} : memref<72x512xf32, #tpu.memory_space<vmem>>, vector<8x256xf32>,
    %c1_169 = arith.constant 1 : index
    %c0_170 = arith.constant 0 : index
    %c127_171 = arith.constant 127 : index
    %210 = vector.load %arg7[%c1_169, %c0_170, %c127_171] : memref<2x8x512xf32, #tpu.memory_space<vmem>>, vector<1x8x256xf32>
    %211 = vector.shape_cast %210 : vector<1x8x256xf32> to vector<8x256xf32>
    %cst_172 = arith.constant 0.000000e+00 : f32
    %212 = vector.shape_cast %18 : vector<1x256xi1> to vector<1x256xi1>
    %213 = vector.broadcast %212 : vector<1x256xi1> to vector<8x256xi1>
    %214 = vector.broadcast %cst_172 : f32 to vector<8x256xf32>
    %215 = arith.select %213, %211, %214 : vector<8x256xi1>, vector<8x256xf32>
    %c24_173 = arith.constant 24 : index
    %c256_174 = arith.constant 256 : index
    %216 = vector.load %arg8[%c24_173, %c256_174] : memref<72x512xf32, #tpu.memory_space<vmem>>, vector<8x256xf32>
    tpu.vector_store %arg8[%c24_173, %c256_174], %215 {strides = array<i32>} : memref<72x512xf32, #tpu.memory_space<vmem>>, vector<8x256xf32>,
    %c0_175 = arith.constant 0 : index
    %c0_176 = arith.constant 0 : index
    %c128_177 = arith.constant 128 : index
    %217 = vector.load %arg7[%c0_175, %c0_176, %c128_177] : memref<2x8x512xf32, #tpu.memory_space<vmem>>, vector<1x8x256xf32>
    %218 = vector.shape_cast %217 : vector<1x8x256xf32> to vector<8x256xf32>
    %c32_178 = arith.constant 32 : index
    %c0_179 = arith.constant 0 : index
    %219 = vector.load %arg8[%c32_178, %c0_179] : memref<72x512xf32, #tpu.memory_space<vmem>>, vector<8x256xf32>
    tpu.vector_store %arg8[%c32_178, %c0_179], %218 {strides = array<i32>} : memref<72x512xf32, #tpu.memory_space<vmem>>, vector<8x256xf32>,
    %c1_180 = arith.constant 1 : index
    %c0_181 = arith.constant 0 : index
    %c128_182 = arith.constant 128 : index
    %220 = vector.load %arg7[%c1_180, %c0_181, %c128_182] : memref<2x8x512xf32, #tpu.memory_space<vmem>>, vector<1x8x256xf32>
    %221 = vector.shape_cast %220 : vector<1x8x256xf32> to vector<8x256xf32>
    %c32_183 = arith.constant 32 : index
    %c256_184 = arith.constant 256 : index
    %222 = vector.load %arg8[%c32_183, %c256_184] : memref<72x512xf32, #tpu.memory_space<vmem>>, vector<8x256xf32>
    tpu.vector_store %arg8[%c32_183, %c256_184], %221 {strides = array<i32>} : memref<72x512xf32, #tpu.memory_space<vmem>>, vector<8x256xf32>,
    %c0_185 = arith.constant 0 : index
    %c0_186 = arith.constant 0 : index
    %c129_187 = arith.constant 129 : index
    %223 = vector.load %arg7[%c0_185, %c0_186, %c129_187] : memref<2x8x512xf32, #tpu.memory_space<vmem>>, vector<1x8x256xf32>
    %224 = vector.shape_cast %223 : vector<1x8x256xf32> to vector<8x256xf32>
    %cst_188 = arith.constant 0.000000e+00 : f32
    %225 = vector.shape_cast %20 : vector<1x256xi1> to vector<1x256xi1>
    %226 = vector.broadcast %225 : vector<1x256xi1> to vector<8x256xi1>
    %227 = vector.broadcast %cst_188 : f32 to vector<8x256xf32>
    %228 = arith.select %226, %224, %227 : vector<8x256xi1>, vector<8x256xf32>
    %c40_189 = arith.constant 40 : index
    %c0_190 = arith.constant 0 : index
    %229 = vector.load %arg8[%c40_189, %c0_190] : memref<72x512xf32, #tpu.memory_space<vmem>>, vector<8x256xf32>
    tpu.vector_store %arg8[%c40_189, %c0_190], %228 {strides = array<i32>} : memref<72x512xf32, #tpu.memory_space<vmem>>, vector<8x256xf32>,
    %c1_191 = arith.constant 1 : index
    %c0_192 = arith.constant 0 : index
    %c129_193 = arith.constant 129 : index
    %230 = vector.load %arg7[%c1_191, %c0_192, %c129_193] : memref<2x8x512xf32, #tpu.memory_space<vmem>>, vector<1x8x256xf32>
    %231 = vector.shape_cast %230 : vector<1x8x256xf32> to vector<8x256xf32>
    %cst_194 = arith.constant 0.000000e+00 : f32
    %232 = vector.shape_cast %20 : vector<1x256xi1> to vector<1x256xi1>
    %233 = vector.broadcast %232 : vector<1x256xi1> to vector<8x256xi1>
    %234 = vector.broadcast %cst_194 : f32 to vector<8x256xf32>
    %235 = arith.select %233, %231, %234 : vector<8x256xi1>, vector<8x256xf32>
    %c40_195 = arith.constant 40 : index
    %c256_196 = arith.constant 256 : index
    %236 = vector.load %arg8[%c40_195, %c256_196] : memref<72x512xf32, #tpu.memory_space<vmem>>, vector<8x256xf32>
    tpu.vector_store %arg8[%c40_195, %c256_196], %235 {strides = array<i32>} : memref<72x512xf32, #tpu.memory_space<vmem>>, vector<8x256xf32>,
    %c0_197 = arith.constant 0 : index
    %c0_198 = arith.constant 0 : index
    %c143_199 = arith.constant 143 : index
    %237 = vector.load %arg7[%c0_197, %c0_198, %c143_199] : memref<2x8x512xf32, #tpu.memory_space<vmem>>, vector<1x8x256xf32>
    %238 = vector.shape_cast %237 : vector<1x8x256xf32> to vector<8x256xf32>
    %cst_200 = arith.constant 0.000000e+00 : f32
    %239 = vector.shape_cast %18 : vector<1x256xi1> to vector<1x256xi1>
    %240 = vector.broadcast %239 : vector<1x256xi1> to vector<8x256xi1>
    %241 = vector.broadcast %cst_200 : f32 to vector<8x256xf32>
    %242 = arith.select %240, %238, %241 : vector<8x256xi1>, vector<8x256xf32>
    %c48_201 = arith.constant 48 : index
    %c0_202 = arith.constant 0 : index
    %243 = vector.load %arg8[%c48_201, %c0_202] : memref<72x512xf32, #tpu.memory_space<vmem>>, vector<8x256xf32>
    tpu.vector_store %arg8[%c48_201, %c0_202], %242 {strides = array<i32>} : memref<72x512xf32, #tpu.memory_space<vmem>>, vector<8x256xf32>,
    %c1_203 = arith.constant 1 : index
    %c0_204 = arith.constant 0 : index
    %c143_205 = arith.constant 143 : index
    %244 = vector.load %arg7[%c1_203, %c0_204, %c143_205] : memref<2x8x512xf32, #tpu.memory_space<vmem>>, vector<1x8x256xf32>
    %245 = vector.shape_cast %244 : vector<1x8x256xf32> to vector<8x256xf32>
    %cst_206 = arith.constant 0.000000e+00 : f32
    %246 = vector.shape_cast %18 : vector<1x256xi1> to vector<1x256xi1>
    %247 = vector.broadcast %246 : vector<1x256xi1> to vector<8x256xi1>
    %248 = vector.broadcast %cst_206 : f32 to vector<8x256xf32>
    %249 = arith.select %247, %245, %248 : vector<8x256xi1>, vector<8x256xf32>
    %c48_207 = arith.constant 48 : index
    %c256_208 = arith.constant 256 : index
    %250 = vector.load %arg8[%c48_207, %c256_208] : memref<72x512xf32, #tpu.memory_space<vmem>>, vector<8x256xf32>
    tpu.vector_store %arg8[%c48_207, %c256_208], %249 {strides = array<i32>} : memref<72x512xf32, #tpu.memory_space<vmem>>, vector<8x256xf32>,
    %c0_209 = arith.constant 0 : index
    %c0_210 = arith.constant 0 : index
    %c144_211 = arith.constant 144 : index
    %251 = vector.load %arg7[%c0_209, %c0_210, %c144_211] : memref<2x8x512xf32, #tpu.memory_space<vmem>>, vector<1x8x256xf32>
    %252 = vector.shape_cast %251 : vector<1x8x256xf32> to vector<8x256xf32>
    %c56_212 = arith.constant 56 : index
    %c0_213 = arith.constant 0 : index
    %253 = vector.load %arg8[%c56_212, %c0_213] : memref<72x512xf32, #tpu.memory_space<vmem>>, vector<8x256xf32>
    tpu.vector_store %arg8[%c56_212, %c0_213], %252 {strides = array<i32>} : memref<72x512xf32, #tpu.memory_space<vmem>>, vector<8x256xf32>,
    %c1_214 = arith.constant 1 : index
    %c0_215 = arith.constant 0 : index
    %c144_216 = arith.constant 144 : index
    %254 = vector.load %arg7[%c1_214, %c0_215, %c144_216] : memref<2x8x512xf32, #tpu.memory_space<vmem>>, vector<1x8x256xf32>
    %255 = vector.shape_cast %254 : vector<1x8x256xf32> to vector<8x256xf32>
    %c56_217 = arith.constant 56 : index
    %c256_218 = arith.constant 256 : index
    %256 = vector.load %arg8[%c56_217, %c256_218] : memref<72x512xf32, #tpu.memory_space<vmem>>, vector<8x256xf32>
    tpu.vector_store %arg8[%c56_217, %c256_218], %255 {strides = array<i32>} : memref<72x512xf32, #tpu.memory_space<vmem>>, vector<8x256xf32>,
    %c0_219 = arith.constant 0 : index
    %c0_220 = arith.constant 0 : index
    %c145_221 = arith.constant 145 : index
    %257 = vector.load %arg7[%c0_219, %c0_220, %c145_221] : memref<2x8x512xf32, #tpu.memory_space<vmem>>, vector<1x8x256xf32>
    %258 = vector.shape_cast %257 : vector<1x8x256xf32> to vector<8x256xf32>
    %cst_222 = arith.constant 0.000000e+00 : f32
    %259 = vector.shape_cast %20 : vector<1x256xi1> to vector<1x256xi1>
    %260 = vector.broadcast %259 : vector<1x256xi1> to vector<8x256xi1>
    %261 = vector.broadcast %cst_222 : f32 to vector<8x256xf32>
    %262 = arith.select %260, %258, %261 : vector<8x256xi1>, vector<8x256xf32>
    %c64_223 = arith.constant 64 : index
    %c0_224 = arith.constant 0 : index
    %263 = vector.load %arg8[%c64_223, %c0_224] : memref<72x512xf32, #tpu.memory_space<vmem>>, vector<8x256xf32>
    tpu.vector_store %arg8[%c64_223, %c0_224], %262 {strides = array<i32>} : memref<72x512xf32, #tpu.memory_space<vmem>>, vector<8x256xf32>,
    %c1_225 = arith.constant 1 : index
    %c0_226 = arith.constant 0 : index
    %c145_227 = arith.constant 145 : index
    %264 = vector.load %arg7[%c1_225, %c0_226, %c145_227] : memref<2x8x512xf32, #tpu.memory_space<vmem>>, vector<1x8x256xf32>
    %265 = vector.shape_cast %264 : vector<1x8x256xf32> to vector<8x256xf32>
    %cst_228 = arith.constant 0.000000e+00 : f32
    %266 = vector.shape_cast %20 : vector<1x256xi1> to vector<1x256xi1>
    %267 = vector.broadcast %266 : vector<1x256xi1> to vector<8x256xi1>
    %268 = vector.broadcast %cst_228 : f32 to vector<8x256xf32>
    %269 = arith.select %267, %265, %268 : vector<8x256xi1>, vector<8x256xf32>
    %c64_229 = arith.constant 64 : index
    %c256_230 = arith.constant 256 : index
    %270 = vector.load %arg8[%c64_229, %c256_230] : memref<72x512xf32, #tpu.memory_space<vmem>>, vector<8x256xf32>
    tpu.vector_store %arg8[%c64_229, %c256_230], %269 {strides = array<i32>} : memref<72x512xf32, #tpu.memory_space<vmem>>, vector<8x256xf32>,
    %c0_231 = arith.constant 0 : index
    %c0_232 = arith.constant 0 : index
    %271 = vector.load %arg4[%c0_231, %c0_232] : memref<4x72xf32, #tpu.memory_space<vmem>>, vector<4x72xf32>
    %c0_233 = arith.constant 0 : index
    %c0_234 = arith.constant 0 : index
    %272 = vector.load %arg8[%c0_233, %c0_234] : memref<72x512xf32, #tpu.memory_space<vmem>>, vector<72x512xf32>
    %cst_235 = arith.constant dense<0.000000e+00> : vector<4x512xf32>
    %273 = tpu.matmul %271, %272, %cst_235 {dimension_numbers = #tpu.dot_dimension_numbers<[1], [0], [0], [1], [0, 0, 1, 1], [], []>} : vector<4x72xf32>, vector<72x512xf32>, vector<4x512xf32> -> vector<4x512xf32>
    %c0_236 = arith.constant 0 : index
    %c0_237 = arith.constant 0 : index
    %274 = vector.load %arg5[%c0_236, %c0_237] : memref<4x1xf32, #tpu.memory_space<vmem>>, vector<4x1xf32>
    %275 = vector.broadcast %274 : vector<4x1xf32> to vector<4x512xf32>
    %276 = arith.addf %273, %275 : vector<4x512xf32>
    %277 = vector.extract_strided_slice %276 {offsets = [0, 0], sizes = [4, 256], strides = [1, 1]} : vector<4x512xf32> to vector<4x256xf32>
    %c0_238 = arith.constant 0 : index
    %c0_239 = arith.constant 0 : index
    %c0_240 = arith.constant 0 : index
    %278 = vector.load %arg1[%c0_238, %c0_239, %c0_240] : memref<2x4x256xf32, #tpu.memory_space<vmem>>, vector<1x4x256xf32>
    %279 = vector.shape_cast %278 : vector<1x4x256xf32> to vector<4x256xf32>
    %280 = arith.addf %277, %279 : vector<4x256xf32>
    %cst_241 = arith.constant 0.000000e+00 : f32
    %281 = vector.broadcast %cst_241 : f32 to vector<4x256xf32>
    %282 = arith.maximumf %280, %281 : vector<4x256xf32>
    %c0_242 = arith.constant 0 : index
    %c0_243 = arith.constant 0 : index
    %c0_244 = arith.constant 0 : index
    %283 = vector.load %arg6[%c0_242, %c0_243, %c0_244] : memref<2x4x256xf32, #tpu.memory_space<vmem>>, vector<1x4x256xf32>
    %284 = vector.shape_cast %283 : vector<1x4x256xf32> to vector<4x256xf32>
    %285 = vector.shape_cast %282 : vector<4x256xf32> to vector<1x4x256xf32>
    tpu.vector_store %arg6[%c0_242, %c0_243, %c0_244], %285 {strides = array<i32>} : memref<2x4x256xf32, #tpu.memory_space<vmem>>, vector<1x4x256xf32>,
    %286 = vector.extract_strided_slice %276 {offsets = [0, 256], sizes = [4, 256], strides = [1, 1]} : vector<4x512xf32> to vector<4x256xf32>
    %c1_245 = arith.constant 1 : index
    %c0_246 = arith.constant 0 : index
    %c0_247 = arith.constant 0 : index
    %287 = vector.load %arg1[%c1_245, %c0_246, %c0_247] : memref<2x4x256xf32, #tpu.memory_space<vmem>>, vector<1x4x256xf32>
    %288 = vector.shape_cast %287 : vector<1x4x256xf32> to vector<4x256xf32>
    %289 = arith.addf %286, %288 : vector<4x256xf32>
    %cst_248 = arith.constant 0.000000e+00 : f32
    %290 = vector.broadcast %cst_248 : f32 to vector<4x256xf32>
    %291 = arith.maximumf %289, %290 : vector<4x256xf32>
    %c1_249 = arith.constant 1 : index
    %c0_250 = arith.constant 0 : index
    %c0_251 = arith.constant 0 : index
    %292 = vector.load %arg6[%c1_249, %c0_250, %c0_251] : memref<2x4x256xf32, #tpu.memory_space<vmem>>, vector<1x4x256xf32>
    %293 = vector.shape_cast %292 : vector<1x4x256xf32> to vector<4x256xf32>
    %294 = vector.shape_cast %291 : vector<4x256xf32> to vector<1x4x256xf32>
    tpu.vector_store %arg6[%c1_249, %c0_250, %c0_251], %294 {strides = array<i32>} : memref<2x4x256xf32, #tpu.memory_space<vmem>>, vector<1x4x256xf32>,
    return
  }
  func.func @transform_0(%arg0: i32) -> (i32, i32, i32) {
    %c0_i32 = arith.constant 0 : i32
    %c0_i32_0 = arith.constant 0 : i32
    %c0_i32_1 = arith.constant 0 : i32
    return %arg0, %c0_i32, %c0_i32_0 : i32, i32, i32
  }
  func.func @transform_1(%arg0: i32) -> (i32, i32) {
    %c0_i32 = arith.constant 0 : i32
    %c0_i32_0 = arith.constant 0 : i32
    %c0_i32_1 = arith.constant 0 : i32
    return %c0_i32, %c0_i32_0 : i32, i32
  }
  func.func @transform_2(%arg0: i32) -> (i32, i32) {
    %c0_i32 = arith.constant 0 : i32
    %c0_i32_0 = arith.constant 0 : i32
    %c0_i32_1 = arith.constant 0 : i32
    return %c0_i32, %c0_i32_0 : i32, i32
  }
  func.func @transform_3(%arg0: i32) -> (i32, i32) {
    %c0_i32 = arith.constant 0 : i32
    %c0_i32_0 = arith.constant 0 : i32
    %c0_i32_1 = arith.constant 0 : i32
    return %c0_i32, %c0_i32_0 : i32, i32
  }
  func.func @transform_4(%arg0: i32) -> (i32, i32) {
    %c0_i32 = arith.constant 0 : i32
    %c0_i32_0 = arith.constant 0 : i32
    %c0_i32_1 = arith.constant 0 : i32
    return %c0_i32, %c0_i32_0 : i32, i32
  }
  func.func @transform_5(%arg0: i32) -> (i32, i32, i32) {
    %c0_i32 = arith.constant 0 : i32
    %c0_i32_0 = arith.constant 0 : i32
    %c0_i32_1 = arith.constant 0 : i32
    return %arg0, %c0_i32, %c0_i32_0 : i32, i32, i32
  }
}

</mosaic_0001>

<llo_original>
// kernel: tpu_custom_call.1
$region0: #{tpu_custom_call.1}
  #allocation0 [shape = 'u32[]', space=smem, size = 0x4, offset = 0x4, fixed_abs, tag = 'smem constant byte address 0x4 - core index']
  #allocation1 [shape = 'u32[144,128]{1,0:T(1,128)}', space=vmem, size = 0x12000, scoped, tag = 'internal scratch']
  #allocation2 [shape = 'f32[2,8,512]{2,1,0:T(8,128)}', space=vmem, size = 0x8000, scoped, tag = 'scratch operand']
  #allocation3 [shape = 'f32[72,512]{1,0:T(8,128)}', space=vmem, size = 0x24000, scoped, tag = 'scratch operand']
  %s0 = inlined_call_operand.hbm [shape: f32[2,4,256], index: 0, kind: input, shape index: {}]
  %s1 = inlined_call_operand.vmem [shape: f32[4,72], index: 1, kind: input, shape index: {}]
  %s2 = inlined_call_operand.vmem [shape: f32[4,1], index: 2, kind: input, shape index: {}]
  %s3 = inlined_call_operand.vmem [shape: f32[4,72], index: 3, kind: input, shape index: {}]
  %s4 = inlined_call_operand.vmem [shape: f32[4,1], index: 4, kind: input, shape index: {}]
  %s5 = inlined_call_operand.hbm [shape: f32[2,4,256], index: 5, kind: output, shape index: {}]
  %s6 = sld [smem:[#allocation0]]
  $region34: #{tpu_custom_call.1} parent=0
    _
  %s8 = ssub.s32 1, %s6
  %s9 = scalar_select 0, %s8, %s6
  $region1: #{tpu_custom_call.1} parent=0
    #allocation4 [shape = 'u8[8192]{0}', space=vmem, size = 0x2000, scoped, tag = 'input window, operand 0, single buffered']
    #allocation5 [shape = 's32[1]{0}', space=sflag, size = 0x4, scoped, tag = 'scoped memory for tpu_custom_call.1']
    #allocation6 [shape = 's32[1]{0}', space=sflag, size = 0x4, scoped, tag = 'scoped memory for tpu_custom_call.1']
    #allocation7 [shape = 'u8[8192]{0}', space=vmem, size = 0x2000, scoped, tag = 'output window, operand 0, single buffered']
    %10 = vsyncpa [#allocation5], 0
    %11 = vsyncpa [#allocation6], 0
    // Predicated region
    $region2: #{tpu_custom_call.1} parent=1 // pred_check
      _
    $region3: #{tpu_custom_call.1} parent=1 // pred_check_branch
      %13 = sbr.rel (0) target = $region5
    $region4: #{tpu_custom_call.1} parent=1 // pred_region
      %s15 = ssub.s32 256, 256
      %16 = vsyncadd [#allocation5], %s15
      %s17 = sshll.u32 [#allocation4], 4
      %s18 = int_to_ptr.vmem [resolvable:$true] %s17
      %23 = dma.hbm_to_vmem [thread:$0]  %s0, 256, %s18, [#allocation5], 128, 128, 8
    $region5: #{tpu_custom_call.1} parent=1 // pred_fallthru
      _
    // Predicated region
    $region6: #{tpu_custom_call.1} parent=1 // pred_check
      _
    $region7: #{tpu_custom_call.1} parent=1 // pred_check_branch
      %25 = sbr.rel (0) target = $region9
    $region8: #{tpu_custom_call.1} parent=1 // pred_region
      _
    $region9: #{tpu_custom_call.1} parent=1 // pred_fallthru
      _
    // Predicated region
    $region10: #{tpu_custom_call.1} parent=1 // pred_check
      _
    $region11: #{tpu_custom_call.1} parent=1 // pred_check_branch
      %27 = sbr.rel (0) target = $region13
    $region12: #{tpu_custom_call.1} parent=1 // pred_region
      _
    $region13: #{tpu_custom_call.1} parent=1 // pred_fallthru
      _
    // Predicated region
    $region14: #{tpu_custom_call.1} parent=1 // pred_check
      _
    $region15: #{tpu_custom_call.1} parent=1 // pred_check_branch
      %29 = sbr.rel (0) target = $region17
    $region16: #{tpu_custom_call.1} parent=1 // pred_region
      _
    $region17: #{tpu_custom_call.1} parent=1 // pred_fallthru
      _
    // Predicated region
    $region18: #{tpu_custom_call.1} parent=1 // pred_check
      _
    $region19: #{tpu_custom_call.1} parent=1 // pred_check_branch
      %31 = sbr.rel (0) target = $region21
    $region20: #{tpu_custom_call.1} parent=1 // pred_region
      _
    $region21: #{tpu_custom_call.1} parent=1 // pred_fallthru
      _
    // Predicated region
    $region22: #{tpu_custom_call.1} parent=1 // pred_check
      _
    $region23: #{tpu_custom_call.1} parent=1 // pred_check_branch
      %33 = sbr.rel (0) target = $region25
    $region24: #{tpu_custom_call.1} parent=1 // pred_region
      %34 = dma.done [#allocation5], 256
    $region25: #{tpu_custom_call.1} parent=1 // pred_fallthru
      _
    %v35 = vlaneseq
    %v36 = vand.u32 %v35, 127
    %v37 = vadd.s32 %v36, 128
    %vm38 = vcmp.lt.s32.totalorder %v36, 0
    %v39 = vsub.s32 0, %v36
    %v40 = vsel %vm38, %v39, %v36
    %v41 = vshrl.u32 %v40, 4
    %v42 = vand.u32 %v40, 15
    %v43 = vsub.s32 0, %v42
    %v44 = vsel %vm38, %v43, %v42
    %vm45 = vcmp.lt.s32.totalorder %v37, 0
    %v46 = vsub.s32 0, %v37
    %v47 = vsel %vm45, %v46, %v37
    %v48 = vshrl.u32 %v47, 4
    %v49 = vand.u32 %v47, 15
    %v50 = vsub.s32 0, %v49
    %v51 = vsel %vm45, %v50, %v49
    %vm52 = vcmp.ne.s32.totalorder %v44, 0
    %vm53 = vcmp.ne.s32.totalorder %v51, 0
    %vm54 = vcmp.lt.s32.totalorder %v44, 0
    %vm55 = vcmp.lt.s32.totalorder %v51, 0
    %vm56 = vmand %vm54, %vm52
    %vm57 = vmand %vm55, %vm53
    %v58 = vadd.s32 %v44, 16
    %v59 = vadd.s32 %v51, 16
    %v60 = vsel %vm56, %v58, %v44
    %v61 = vsel %vm57, %v59, %v51
    %vm62 = vcmp.ge.s32.totalorder %v60, 1
    %vm63 = vcmp.ge.s32.totalorder %v61, 1
    %vm64 = vcmp.le.s32.totalorder %v60, 14
    %vm65 = vcmp.le.s32.totalorder %v61, 14
    %66 = vst [vmem:[#allocation2] sm:$0xff] 0.0
    %67 = vst [vmem:[#allocation2 + $0x18] sm:$0xff] 0.0
    %s68 = scalar_lea.vmem [#allocation2], 32
    %69 = vst [vmem:[%s68] sm:$0xff] 0.0
    %70 = vst [vmem:[%s68 + $0x18] sm:$0xff] 0.0
    %71 = vst [vmem:[#allocation2 + $0x8] sm:$0xf0] 0.0
    %72 = vst [vmem:[#allocation2 + $0x10] sm:$0xf0] 0.0
    %73 = vst [vmem:[%s68 + $0x8] sm:$0xf0] 0.0
    %74 = vst [vmem:[%s68 + $0x10] sm:$0xf0] 0.0
    %v75 = vld [vmem:[#allocation4] sm:$0xff]
    %v77 = vcombine.high %v75, %v75
    %79 = vst [vmem:[#allocation2 + $0x8] sm:$0xf] %v75
    %80 = vst [vmem:[#allocation2 + $0x10] sm:$0xf] %v77
    %s81 = scalar_lea.vmem [#allocation4], 8
    %v82 = vld [vmem:[%s81] sm:$0xff]
    %v84 = vcombine.high %v82, %v82
    %86 = vst [vmem:[%s68 + $0x8] sm:$0xf] %v82
    %87 = vst [vmem:[%s68 + $0x10] sm:$0xf] %v84
    %v88 = vld [vmem:[#allocation2] sm:$0xff]
    %v89 = vld [vmem:[#allocation2 + $0x8] sm:$0xff]
    %v90 = vld [vmem:[#allocation2 + $0x10] sm:$0xff]
    %v91 = vsel %vm62, 1, 0
    %v92 = vsel %vm63, 1, 0
    %vm93 = vcmp.eq.s32.totalorder %v91, 1
    %vm94 = vcmp.eq.s32.totalorder %v92, 1
    %98 = vrot.lane.b32.xlu0 %v88, 17
    %v99 = vpop.permute.xlu0 %98
    %100 = vrot.lane.b32.xlu0 %v89, 17
    %v101 = vpop.permute.xlu0 %100
    %102 = vrot.lane.b32.xlu0 %v90, 17
    %v103 = vpop.permute.xlu0 %102
    %vm104 = vcmask 138240
    %v105 = vsel %vm104, %v99, %v101
    %v106 = vsel %vm104, %v101, %v103
    %v109 = vsel %vm93, %v105, 0.0
    %v110 = vsel %vm94, %v106, 0.0
    %111 = vst [vmem:[#allocation3] sm:$0xff] %v109
    %112 = vst [vmem:[#allocation3 + $0x8] sm:$0xff] %v110
    %v113 = vld [vmem:[%s68] sm:$0xff]
    %v114 = vld [vmem:[%s68 + $0x8] sm:$0xff]
    %v115 = vld [vmem:[%s68 + $0x10] sm:$0xff]
    %119 = vrot.lane.b32.xlu0 %v113, 17
    %v120 = vpop.permute.xlu0 %119
    %121 = vrot.lane.b32.xlu0 %v114, 17
    %v122 = vpop.permute.xlu0 %121
    %123 = vrot.lane.b32.xlu0 %v115, 17
    %v124 = vpop.permute.xlu0 %123
    %v125 = vsel %vm104, %v120, %v122
    %v126 = vsel %vm104, %v122, %v124
    %v129 = vsel %vm93, %v125, 0.0
    %v130 = vsel %vm94, %v126, 0.0
    %131 = vst [vmem:[#allocation3 + $0x10] sm:$0xff] %v129
    %132 = vst [vmem:[#allocation3 + $0x18] sm:$0xff] %v130
    %v133 = vld [vmem:[#allocation2] sm:$0xff]
    %v134 = vld [vmem:[#allocation2 + $0x8] sm:$0xff]
    %v135 = vld [vmem:[#allocation2 + $0x10] sm:$0xff]
    %139 = vrot.lane.b32.xlu0 %v133, 16
    %v140 = vpop.permute.xlu0 %139
    %141 = vrot.lane.b32.xlu0 %v134, 16
    %v142 = vpop.permute.xlu0 %141
    %143 = vrot.lane.b32.xlu0 %v135, 16
    %v144 = vpop.permute.xlu0 %143
    %vm145 = vcmask 130048
    %v146 = vsel %vm145, %v140, %v142
    %v147 = vsel %vm145, %v142, %v144
    %150 = vst [vmem:[#allocation3 + $0x20] sm:$0xff] %v146
    %151 = vst [vmem:[#allocation3 + $0x28] sm:$0xff] %v147
    %v152 = vld [vmem:[%s68] sm:$0xff]
    %v153 = vld [vmem:[%s68 + $0x8] sm:$0xff]
    %v154 = vld [vmem:[%s68 + $0x10] sm:$0xff]
    %158 = vrot.lane.b32.xlu0 %v152, 16
    %v159 = vpop.permute.xlu0 %158
    %160 = vrot.lane.b32.xlu0 %v153, 16
    %v161 = vpop.permute.xlu0 %160
    %162 = vrot.lane.b32.xlu0 %v154, 16
    %v163 = vpop.permute.xlu0 %162
    %v164 = vsel %vm145, %v159, %v161
    %v165 = vsel %vm145, %v161, %v163
    %168 = vst [vmem:[#allocation3 + $0x30] sm:$0xff] %v164
    %169 = vst [vmem:[#allocation3 + $0x38] sm:$0xff] %v165
    %v170 = vld [vmem:[#allocation2] sm:$0xff]
    %v171 = vld [vmem:[#allocation2 + $0x8] sm:$0xff]
    %v172 = vld [vmem:[#allocation2 + $0x10] sm:$0xff]
    %v173 = vsel %vm64, 1, 0
    %v174 = vsel %vm65, 1, 0
    %vm175 = vcmp.eq.s32.totalorder %v173, 1
    %vm176 = vcmp.eq.s32.totalorder %v174, 1
    %180 = vrot.lane.b32.xlu0 %v170, 15
    %v181 = vpop.permute.xlu0 %180
    %182 = vrot.lane.b32.xlu0 %v171, 15
    %v183 = vpop.permute.xlu0 %182
    %184 = vrot.lane.b32.xlu0 %v172, 15
    %v185 = vpop.permute.xlu0 %184
    %vm186 = vcmask 121856
    %v187 = vsel %vm186, %v181, %v183
    %v188 = vsel %vm186, %v183, %v185
    %v191 = vsel %vm175, %v187, 0.0
    %v192 = vsel %vm176, %v188, 0.0
    %193 = vst [vmem:[#allocation3 + $0x40] sm:$0xff] %v191
    %194 = vst [vmem:[#allocation3 + $0x48] sm:$0xff] %v192
    %v195 = vld [vmem:[%s68] sm:$0xff]
    %v196 = vld [vmem:[%s68 + $0x8] sm:$0xff]
    %v197 = vld [vmem:[%s68 + $0x10] sm:$0xff]
    %201 = vrot.lane.b32.xlu0 %v195, 15
    %v202 = vpop.permute.xlu0 %201
    %203 = vrot.lane.b32.xlu0 %v196, 15
    %v204 = vpop.permute.xlu0 %203
    %205 = vrot.lane.b32.xlu0 %v197, 15
    %v206 = vpop.permute.xlu0 %205
    %v207 = vsel %vm186, %v202, %v204
    %v208 = vsel %vm186, %v204, %v206
    %v211 = vsel %vm175, %v207, 0.0
    %v212 = vsel %vm176, %v208, 0.0
    %213 = vst [vmem:[#allocation3 + $0x50] sm:$0xff] %v211
    %214 = vst [vmem:[#allocation3 + $0x58] sm:$0xff] %v212
    %v215 = vld [vmem:[#allocation2] sm:$0xff]
    %v216 = vld [vmem:[#allocation2 + $0x8] sm:$0xff]
    %v217 = vld [vmem:[#allocation2 + $0x10] sm:$0xff]
    %221 = vrot.lane.b32.xlu0 %v215, 1
    %v222 = vpop.permute.xlu0 %221
    %223 = vrot.lane.b32.xlu0 %v216, 1
    %v224 = vpop.permute.xlu0 %223
    %225 = vrot.lane.b32.xlu0 %v217, 1
    %v226 = vpop.permute.xlu0 %225
    %vm227 = vcmask 7168
    %v228 = vsel %vm227, %v222, %v224
    %v229 = vsel %vm227, %v224, %v226
    %v232 = vsel %vm93, %v228, 0.0
    %v233 = vsel %vm94, %v229, 0.0
    %234 = vst [vmem:[#allocation3 + $0x60] sm:$0xff] %v232
    %235 = vst [vmem:[#allocation3 + $0x68] sm:$0xff] %v233
    %v236 = vld [vmem:[%s68] sm:$0xff]
    %v237 = vld [vmem:[%s68 + $0x8] sm:$0xff]
    %v238 = vld [vmem:[%s68 + $0x10] sm:$0xff]
    %242 = vrot.lane.b32.xlu0 %v236, 1
    %v243 = vpop.permute.xlu0 %242
    %244 = vrot.lane.b32.xlu0 %v237, 1
    %v245 = vpop.permute.xlu0 %244
    %246 = vrot.lane.b32.xlu0 %v238, 1
    %v247 = vpop.permute.xlu0 %246
    %v248 = vsel %vm227, %v243, %v245
    %v249 = vsel %vm227, %v245, %v247
    %v252 = vsel %vm93, %v248, 0.0
    %v253 = vsel %vm94, %v249, 0.0
    %254 = vst [vmem:[#allocation3 + $0x70] sm:$0xff] %v252
    %255 = vst [vmem:[#allocation3 + $0x78] sm:$0xff] %v253
    %v256 = vld [vmem:[#allocation2 + $0x8] sm:$0xff]
    %v257 = vld [vmem:[#allocation2 + $0x10] sm:$0xff]
    %258 = vst [vmem:[#allocation3 + $0x80] sm:$0xff] %v256
    %259 = vst [vmem:[#allocation3 + $0x88] sm:$0xff] %v257
    %v260 = vld [vmem:[%s68 + $0x8] sm:$0xff]
    %v261 = vld [vmem:[%s68 + $0x10] sm:$0xff]
    %262 = vst [vmem:[#allocation3 + $0x90] sm:$0xff] %v260
    %263 = vst [vmem:[#allocation3 + $0x98] sm:$0xff] %v261
    %v264 = vld [vmem:[#allocation2 + $0x8] sm:$0xff]
    %v265 = vld [vmem:[#allocation2 + $0x10] sm:$0xff]
    %v266 = vld [vmem:[#allocation2 + $0x18] sm:$0xff]
    %270 = vrot.lane.b32.xlu0 %v264, 127
    %v271 = vpop.permute.xlu0 %270
    %272 = vrot.lane.b32.xlu0 %v265, 127
    %v273 = vpop.permute.xlu0 %272
    %274 = vrot.lane.b32.xlu0 %v266, 127
    %v275 = vpop.permute.xlu0 %274
    %vm276 = vcmask 1039360
    %v277 = vsel %vm276, %v271, %v273
    %v278 = vsel %vm276, %v273, %v275
    %v281 = vsel %vm175, %v277, 0.0
    %v282 = vsel %vm176, %v278, 0.0
    %283 = vst [vmem:[#allocation3 + $0xa0] sm:$0xff] %v281
    %284 = vst [vmem:[#allocation3 + $0xa8] sm:$0xff] %v282
    %v285 = vld [vmem:[%s68 + $0x8] sm:$0xff]
    %v286 = vld [vmem:[%s68 + $0x10] sm:$0xff]
    %v287 = vld [vmem:[%s68 + $0x18] sm:$0xff]
    %291 = vrot.lane.b32.xlu0 %v285, 127
    %v292 = vpop.permute.xlu0 %291
    %293 = vrot.lane.b32.xlu0 %v286, 127
    %v294 = vpop.permute.xlu0 %293
    %295 = vrot.lane.b32.xlu0 %v287, 127
    %v296 = vpop.permute.xlu0 %295
    %v297 = vsel %vm276, %v292, %v294
    %v298 = vsel %vm276, %v294, %v296
    %v301 = vsel %vm175, %v297, 0.0
    %v302 = vsel %vm176, %v298, 0.0
    %303 = vst [vmem:[#allocation3 + $0xb0] sm:$0xff] %v301
    %304 = vst [vmem:[#allocation3 + $0xb8] sm:$0xff] %v302
    %v305 = vld [vmem:[#allocation2 + $0x8] sm:$0xff]
    %v306 = vld [vmem:[#allocation2 + $0x10] sm:$0xff]
    %v307 = vld [vmem:[#allocation2 + $0x18] sm:$0xff]
    %311 = vrot.lane.b32.xlu0 %v305, 113
    %v312 = vpop.permute.xlu0 %311
    %313 = vrot.lane.b32.xlu0 %v306, 113
    %v314 = vpop.permute.xlu0 %313
    %315 = vrot.lane.b32.xlu0 %v307, 113
    %v316 = vpop.permute.xlu0 %315
    %vm317 = vcmask 924672
    %v318 = vsel %vm317, %v312, %v314
    %v319 = vsel %vm317, %v314, %v316
    %v322 = vsel %vm93, %v318, 0.0
    %v323 = vsel %vm94, %v319, 0.0
    %324 = vst [vmem:[#allocation3 + $0xc0] sm:$0xff] %v322
    %325 = vst [vmem:[#allocation3 + $0xc8] sm:$0xff] %v323
    %v326 = vld [vmem:[%s68 + $0x8] sm:$0xff]
    %v327 = vld [vmem:[%s68 + $0x10] sm:$0xff]
    %v328 = vld [vmem:[%s68 + $0x18] sm:$0xff]
    %332 = vrot.lane.b32.xlu0 %v326, 113
    %v333 = vpop.permute.xlu0 %332
    %334 = vrot.lane.b32.xlu0 %v327, 113
    %v335 = vpop.permute.xlu0 %334
    %336 = vrot.lane.b32.xlu0 %v328, 113
    %v337 = vpop.permute.xlu0 %336
    %v338 = vsel %vm317, %v333, %v335
    %v339 = vsel %vm317, %v335, %v337
    %v342 = vsel %vm93, %v338, 0.0
    %v343 = vsel %vm94, %v339, 0.0
    %344 = vst [vmem:[#allocation3 + $0xd0] sm:$0xff] %v342
    %345 = vst [vmem:[#allocation3 + $0xd8] sm:$0xff] %v343
    %v346 = vld [vmem:[#allocation2 + $0x8] sm:$0xff]
    %v347 = vld [vmem:[#allocation2 + $0x10] sm:$0xff]
    %v348 = vld [vmem:[#allocation2 + $0x18] sm:$0xff]
    %352 = vrot.lane.b32.xlu0 %v346, 112
    %v353 = vpop.permute.xlu0 %352
    %354 = vrot.lane.b32.xlu0 %v347, 112
    %v355 = vpop.permute.xlu0 %354
    %356 = vrot.lane.b32.xlu0 %v348, 112
    %v357 = vpop.permute.xlu0 %356
    %vm358 = vcmask 916480
    %v359 = vsel %vm358, %v353, %v355
    %v360 = vsel %vm358, %v355, %v357
    %363 = vst [vmem:[#allocation3 + $0xe0] sm:$0xff] %v359
    %364 = vst [vmem:[#allocation3 + $0xe8] sm:$0xff] %v360
    %v365 = vld [vmem:[%s68 + $0x8] sm:$0xff]
    %v366 = vld [vmem:[%s68 + $0x10] sm:$0xff]
    %v367 = vld [vmem:[%s68 + $0x18] sm:$0xff]
    %371 = vrot.lane.b32.xlu0 %v365, 112
    %v372 = vpop.permute.xlu0 %371
    %373 = vrot.lane.b32.xlu0 %v366, 112
    %v374 = vpop.permute.xlu0 %373
    %375 = vrot.lane.b32.xlu0 %v367, 112
    %v376 = vpop.permute.xlu0 %375
    %v377 = vsel %vm358, %v372, %v374
    %v378 = vsel %vm358, %v374, %v376
    %381 = vst [vmem:[#allocation3 + $0xf0] sm:$0xff] %v377
    %382 = vst [vmem:[#allocation3 + $0xf8] sm:$0xff] %v378
    %v383 = vld [vmem:[#allocation2 + $0x8] sm:$0xff]
    %v384 = vld [vmem:[#allocation2 + $0x10] sm:$0xff]
    %v385 = vld [vmem:[#allocation2 + $0x18] sm:$0xff]
    %389 = vrot.lane.b32.xlu0 %v383, 111
    %v390 = vpop.permute.xlu0 %389
    %391 = vrot.lane.b32.xlu0 %v384, 111
    %v392 = vpop.permute.xlu0 %391
    %393 = vrot.lane.b32.xlu0 %v385, 111
    %v394 = vpop.permute.xlu0 %393
    %vm395 = vcmask 908288
    %v396 = vsel %vm395, %v390, %v392
    %v397 = vsel %vm395, %v392, %v394
    %v400 = vsel %vm175, %v396, 0.0
    %v401 = vsel %vm176, %v397, 0.0
    %402 = vst [vmem:[#allocation3 + $0x100] sm:$0xff] %v400
    %403 = vst [vmem:[#allocation3 + $0x108] sm:$0xff] %v401
    %v404 = vld [vmem:[%s68 + $0x8] sm:$0xff]
    %v405 = vld [vmem:[%s68 + $0x10] sm:$0xff]
    %v406 = vld [vmem:[%s68 + $0x18] sm:$0xff]
    %410 = vrot.lane.b32.xlu0 %v404, 111
    %v411 = vpop.permute.xlu0 %410
    %412 = vrot.lane.b32.xlu0 %v405, 111
    %v413 = vpop.permute.xlu0 %412
    %414 = vrot.lane.b32.xlu0 %v406, 111
    %v415 = vpop.permute.xlu0 %414
    %v416 = vsel %vm395, %v411, %v413
    %v417 = vsel %vm395, %v413, %v415
    %v420 = vsel %vm175, %v416, 0.0
    %v421 = vsel %vm176, %v417, 0.0
    %422 = vst [vmem:[#allocation3 + $0x110] sm:$0xff] %v420
    %423 = vst [vmem:[#allocation3 + $0x118] sm:$0xff] %v421
    %v424 = vld [vmem:[%s1] sm:$0xf]
    %v425 = vld [vmem:[#allocation3] sm:$0xff]
    %v426 = vld [vmem:[#allocation3 + $0x8] sm:$0xff]
    %v427 = vld [vmem:[#allocation3 + $0x10] sm:$0xff]
    %v428 = vld [vmem:[#allocation3 + $0x18] sm:$0xff]
    %v429 = vld [vmem:[#allocation3 + $0x20] sm:$0xff]
    %v430 = vld [vmem:[#allocation3 + $0x28] sm:$0xff]
    %v431 = vld [vmem:[#allocation3 + $0x30] sm:$0xff]
    %v432 = vld [vmem:[#allocation3 + $0x38] sm:$0xff]
    %v433 = vld [vmem:[#allocation3 + $0x40] sm:$0xff]
    %v434 = vld [vmem:[#allocation3 + $0x48] sm:$0xff]
    %v435 = vld [vmem:[#allocation3 + $0x50] sm:$0xff]
    %v436 = vld [vmem:[#allocation3 + $0x58] sm:$0xff]
    %v437 = vld [vmem:[#allocation3 + $0x60] sm:$0xff]
    %v438 = vld [vmem:[#allocation3 + $0x68] sm:$0xff]
    %v439 = vld [vmem:[#allocation3 + $0x70] sm:$0xff]
    %v440 = vld [vmem:[#allocation3 + $0x78] sm:$0xff]
    %v441 = vld [vmem:[#allocation3 + $0x80] sm:$0xff]
    %v442 = vld [vmem:[#allocation3 + $0x88] sm:$0xff]
    %v443 = vld [vmem:[#allocation3 + $0x90] sm:$0xff]
    %v444 = vld [vmem:[#allocation3 + $0x98] sm:$0xff]
    %v445 = vld [vmem:[#allocation3 + $0xa0] sm:$0xff]
    %v446 = vld [vmem:[#allocation3 + $0xa8] sm:$0xff]
    %v447 = vld [vmem:[#allocation3 + $0xb0] sm:$0xff]
    %v448 = vld [vmem:[#allocation3 + $0xb8] sm:$0xff]
    %v449 = vld [vmem:[#allocation3 + $0xc0] sm:$0xff]
    %v450 = vld [vmem:[#allocation3 + $0xc8] sm:$0xff]
    %v451 = vld [vmem:[#allocation3 + $0xd0] sm:$0xff]
    %v452 = vld [vmem:[#allocation3 + $0xd8] sm:$0xff]
    %v453 = vld [vmem:[#allocation3 + $0xe0] sm:$0xff]
    %v454 = vld [vmem:[#allocation3 + $0xe8] sm:$0xff]
    %v455 = vld [vmem:[#allocation3 + $0xf0] sm:$0xff]
    %v456 = vld [vmem:[#allocation3 + $0xf8] sm:$0xff]
    %v457 = vld [vmem:[#allocation3 + $0x100] sm:$0xff]
    %v458 = vld [vmem:[#allocation3 + $0x108] sm:$0xff]
    %v459 = vld [vmem:[#allocation3 + $0x110] sm:$0xff]
    %v460 = vld [vmem:[#allocation3 + $0x118] sm:$0xff]
    %v461 = vld [vmem:[%s2] sm:$0xf]
    %463 = vset.pattern.permute.xlu0 0
    %464 = vperm.xlu0 %463, %v461
    %v465 = vpop.permute.xlu0 %464
    %vm467 = vcmask 588800
    %v469 = vsel %vm467, %v424, 0
    %471 = vmatprep.subr.mxu0 0.0
    %472 = vmatpush1.msra.mxu0 0.0
    %473 = vmatprep.subr.mxu0 0.0
    %474 = vmatpush1.msra.mxu0 0.0
    %475 = vmatprep.subr.mxu0 0.0
    %476 = vmatpush1.msra.mxu0 0.0
    %477 = vmatprep.subr.mxu0 0.0
    %478 = vmatpush1.msra.mxu0 0.0
    %479 = vmatprep.subr.mxu0 0.0
    %480 = vmatpush1.msra.mxu0 0.0
    %481 = vmatprep.subr.mxu0 0.0
    %482 = vmatpush1.msra.mxu0 0.0
    %483 = vmatprep.subr.mxu0 0.0
    %484 = vmatpush1.msra.mxu0 0.0
    %485 = vmatprep.subr.mxu0 %v458
    %486 = vmatpush1.msra.mxu0 %v457
    %487 = vmatprep.subr.mxu0 %v454
    %488 = vmatpush1.msra.mxu0 %v453
    %489 = vmatprep.subr.mxu0 %v450
    %490 = vmatpush1.msra.mxu0 %v449
    %491 = vmatprep.subr.mxu0 %v446
    %492 = vmatpush1.msra.mxu0 %v445
    %493 = vmatprep.subr.mxu0 %v442
    %494 = vmatpush1.msra.mxu0 %v441
    %495 = vmatprep.subr.mxu0 %v438
    %496 = vmatpush1.msra.mxu0 %v437
    %497 = vmatprep.subr.mxu0 %v434
    %498 = vmatpush1.msra.mxu0 %v433
    %499 = vmatprep.subr.mxu0 %v430
    %500 = vmatpush1.msra.mxu0 %v429
    %501 = vmatprep.subr.mxu0 %v426
    %502 = vmatpush1.msra.mxu0 %v425
    %503 = vmatprep.subr.mxu0 0.0
    %504 = vmatpush2.msra.mxu0 0.0
    %505 = vmatprep.subr.mxu0 0.0
    %506 = vmatpush2.msra.mxu0 0.0
    %507 = vmatprep.subr.mxu0 0.0
    %508 = vmatpush2.msra.mxu0 0.0
    %509 = vmatprep.subr.mxu0 0.0
    %510 = vmatpush2.msra.mxu0 0.0
    %511 = vmatprep.subr.mxu0 0.0
    %512 = vmatpush2.msra.mxu0 0.0
    %513 = vmatprep.subr.mxu0 0.0
    %514 = vmatpush2.msra.mxu0 0.0
    %515 = vmatprep.subr.mxu0 0.0
    %516 = vmatpush2.msra.mxu0 0.0
    %517 = vmatprep.subr.mxu0 0.0
    %518 = vmatpush2.msra.mxu0 0.0
    %519 = vmatprep.subr.mxu0 0.0
    %520 = vmatpush2.msra.mxu0 0.0
    %521 = vmatprep.subr.mxu0 0.0
    %522 = vmatpush2.msra.mxu0 0.0
    %523 = vmatprep.subr.mxu0 0.0
    %524 = vmatpush2.msra.mxu0 0.0
    %525 = vmatprep.subr.mxu0 0.0
    %526 = vmatpush2.msra.mxu0 0.0
    %527 = vmatprep.subr.mxu0 0.0
    %528 = vmatpush2.msra.mxu0 0.0
    %529 = vmatprep.subr.mxu0 0.0
    %530 = vmatpush2.msra.mxu0 0.0
    %531 = vmatprep.subr.mxu0 0.0
    %532 = vmatpush2.msra.mxu0 0.0
    %533 = vmatprep.subr.mxu0 0.0
    %534 = vmatpush2.msra.mxu0 0.0
    %535 = vmatprep.mubr.f32.mxu0 0.0
    %536 = vmatmul.mubr.f32.gmra.mxu0 %v469
    %v537 = vpop.f32.mrf.mxu0
    %v538 = vadd.f32 %v465, %v537
    %v539 = vpop.f32.mrf.mxu0
    %v540 = vadd.f32 %v465, %v539
    %541 = vdwg.mxu0
    %542 = vmatprep.subr.mxu0 0.0
    %543 = vmatpush1.msra.mxu0 0.0
    %544 = vmatprep.subr.mxu0 0.0
    %545 = vmatpush1.msra.mxu0 0.0
    %546 = vmatprep.subr.mxu0 0.0
    %547 = vmatpush1.msra.mxu0 0.0
    %548 = vmatprep.subr.mxu0 0.0
    %549 = vmatpush1.msra.mxu0 0.0
    %550 = vmatprep.subr.mxu0 0.0
    %551 = vmatpush1.msra.mxu0 0.0
    %552 = vmatprep.subr.mxu0 0.0
    %553 = vmatpush1.msra.mxu0 0.0
    %554 = vmatprep.subr.mxu0 0.0
    %555 = vmatpush1.msra.mxu0 0.0
    %556 = vmatprep.subr.mxu0 %v460
    %557 = vmatpush1.msra.mxu0 %v459
    %558 = vmatprep.subr.mxu0 %v456
    %559 = vmatpush1.msra.mxu0 %v455
    %560 = vmatprep.subr.mxu0 %v452
    %561 = vmatpush1.msra.mxu0 %v451
    %562 = vmatprep.subr.mxu0 %v448
    %563 = vmatpush1.msra.mxu0 %v447
    %564 = vmatprep.subr.mxu0 %v444
    %565 = vmatpush1.msra.mxu0 %v443
    %566 = vmatprep.subr.mxu0 %v440
    %567 = vmatpush1.msra.mxu0 %v439
    %568 = vmatprep.subr.mxu0 %v436
    %569 = vmatpush1.msra.mxu0 %v435
    %570 = vmatprep.subr.mxu0 %v432
    %571 = vmatpush1.msra.mxu0 %v431
    %572 = vmatprep.subr.mxu0 %v428
    %573 = vmatpush1.msra.mxu0 %v427
    %574 = vmatprep.subr.mxu0 0.0
    %575 = vmatpush2.msra.mxu0 0.0
    %576 = vmatprep.subr.mxu0 0.0
    %577 = vmatpush2.msra.mxu0 0.0
    %578 = vmatprep.subr.mxu0 0.0
    %579 = vmatpush2.msra.mxu0 0.0
    %580 = vmatprep.subr.mxu0 0.0
    %581 = vmatpush2.msra.mxu0 0.0
    %582 = vmatprep.subr.mxu0 0.0
    %583 = vmatpush2.msra.mxu0 0.0
    %584 = vmatprep.subr.mxu0 0.0
    %585 = vmatpush2.msra.mxu0 0.0
    %586 = vmatprep.subr.mxu0 0.0
    %587 = vmatpush2.msra.mxu0 0.0
    %588 = vmatprep.subr.mxu0 0.0
    %589 = vmatpush2.msra.mxu0 0.0
    %590 = vmatprep.subr.mxu0 0.0
    %591 = vmatpush2.msra.mxu0 0.0
    %592 = vmatprep.subr.mxu0 0.0
    %593 = vmatpush2.msra.mxu0 0.0
    %594 = vmatprep.subr.mxu0 0.0
    %595 = vmatpush2.msra.mxu0 0.0
    %596 = vmatprep.subr.mxu0 0.0
    %597 = vmatpush2.msra.mxu0 0.0
    %598 = vmatprep.subr.mxu0 0.0
    %599 = vmatpush2.msra.mxu0 0.0
    %600 = vmatprep.subr.mxu0 0.0
    %601 = vmatpush2.msra.mxu0 0.0
    %602 = vmatprep.subr.mxu0 0.0
    %603 = vmatpush2.msra.mxu0 0.0
    %604 = vmatprep.subr.mxu0 0.0
    %605 = vmatpush2.msra.mxu0 0.0
    %606 = vmatprep.mubr.f32.mxu0 0.0
    %607 = vmatmul.mubr.f32.gmra.mxu0 %v469
    %v608 = vpop.f32.mrf.mxu0
    %v609 = vadd.f32 %v465, %v608
    %v610 = vpop.f32.mrf.mxu0
    %v611 = vadd.f32 %v465, %v610
    %612 = vdwg.mxu0
    %v613 = vmax.f32 %v538, 0.0
    %v614 = vmax.f32 %v540, 0.0
    %v615 = vmax.f32 %v609, 0.0
    %v616 = vmax.f32 %v611, 0.0
    %617 = vst [vmem:[#allocation2 + $0x8] sm:$0xf] %v613
    %618 = vst [vmem:[#allocation2 + $0x10] sm:$0xf] %v614
    %619 = vst [vmem:[%s68 + $0x8] sm:$0xf] %v615
    %620 = vst [vmem:[%s68 + $0x10] sm:$0xf] %v616
    %v621 = vld [vmem:[#allocation2] sm:$0xff]
    %v622 = vld [vmem:[#allocation2 + $0x8] sm:$0xff]
    %v623 = vld [vmem:[#allocation2 + $0x10] sm:$0xff]
    %627 = vrot.lane.b32.xlu0 %v621, 17
    %v628 = vpop.permute.xlu0 %627
    %629 = vrot.lane.b32.xlu0 %v622, 17
    %v630 = vpop.permute.xlu0 %629
    %631 = vrot.lane.b32.xlu0 %v623, 17
    %v632 = vpop.permute.xlu0 %631
    %v633 = vsel %vm104, %v628, %v630
    %v634 = vsel %vm104, %v630, %v632
    %v637 = vsel %vm93, %v633, 0.0
    %v638 = vsel %vm94, %v634, 0.0
    %639 = vst [vmem:[#allocation3] sm:$0xff] %v637
    %640 = vst [vmem:[#allocation3 + $0x8] sm:$0xff] %v638
    %v641 = vld [vmem:[%s68] sm:$0xff]
    %v642 = vld [vmem:[%s68 + $0x8] sm:$0xff]
    %v643 = vld [vmem:[%s68 + $0x10] sm:$0xff]
    %647 = vrot.lane.b32.xlu0 %v641, 17
    %v648 = vpop.permute.xlu0 %647
    %649 = vrot.lane.b32.xlu0 %v642, 17
    %v650 = vpop.permute.xlu0 %649
    %651 = vrot.lane.b32.xlu0 %v643, 17
    %v652 = vpop.permute.xlu0 %651
    %v653 = vsel %vm104, %v648, %v650
    %v654 = vsel %vm104, %v650, %v652
    %v657 = vsel %vm93, %v653, 0.0
    %v658 = vsel %vm94, %v654, 0.0
    %659 = vst [vmem:[#allocation3 + $0x10] sm:$0xff] %v657
    %660 = vst [vmem:[#allocation3 + $0x18] sm:$0xff] %v658
    %v661 = vld [vmem:[#allocation2] sm:$0xff]
    %v662 = vld [vmem:[#allocation2 + $0x8] sm:$0xff]
    %v663 = vld [vmem:[#allocation2 + $0x10] sm:$0xff]
    %667 = vrot.lane.b32.xlu0 %v661, 16
    %v668 = vpop.permute.xlu0 %667
    %669 = vrot.lane.b32.xlu0 %v662, 16
    %v670 = vpop.permute.xlu0 %669
    %671 = vrot.lane.b32.xlu0 %v663, 16
    %v672 = vpop.permute.xlu0 %671
    %v673 = vsel %vm145, %v668, %v670
    %v674 = vsel %vm145, %v670, %v672
    %677 = vst [vmem:[#allocation3 + $0x20] sm:$0xff] %v673
    %678 = vst [vmem:[#allocation3 + $0x28] sm:$0xff] %v674
    %v679 = vld [vmem:[%s68] sm:$0xff]
    %v680 = vld [vmem:[%s68 + $0x8] sm:$0xff]
    %v681 = vld [vmem:[%s68 + $0x10] sm:$0xff]
    %685 = vrot.lane.b32.xlu0 %v679, 16
    %v686 = vpop.permute.xlu0 %685
    %687 = vrot.lane.b32.xlu0 %v680, 16
    %v688 = vpop.permute.xlu0 %687
    %689 = vrot.lane.b32.xlu0 %v681, 16
    %v690 = vpop.permute.xlu0 %689
    %v691 = vsel %vm145, %v686, %v688
    %v692 = vsel %vm145, %v688, %v690
    %695 = vst [vmem:[#allocation3 + $0x30] sm:$0xff] %v691
    %696 = vst [vmem:[#allocation3 + $0x38] sm:$0xff] %v692
    %v697 = vld [vmem:[#allocation2] sm:$0xff]
    %v698 = vld [vmem:[#allocation2 + $0x8] sm:$0xff]
    %v699 = vld [vmem:[#allocation2 + $0x10] sm:$0xff]
    %703 = vrot.lane.b32.xlu0 %v697, 15
    %v704 = vpop.permute.xlu0 %703
    %705 = vrot.lane.b32.xlu0 %v698, 15
    %v706 = vpop.permute.xlu0 %705
    %707 = vrot.lane.b32.xlu0 %v699, 15
    %v708 = vpop.permute.xlu0 %707
    %v709 = vsel %vm186, %v704, %v706
    %v710 = vsel %vm186, %v706, %v708
    %v713 = vsel %vm175, %v709, 0.0
    %v714 = vsel %vm176, %v710, 0.0
    %715 = vst [vmem:[#allocation3 + $0x40] sm:$0xff] %v713
    %716 = vst [vmem:[#allocation3 + $0x48] sm:$0xff] %v714
    %v717 = vld [vmem:[%s68] sm:$0xff]
    %v718 = vld [vmem:[%s68 + $0x8] sm:$0xff]
    %v719 = vld [vmem:[%s68 + $0x10] sm:$0xff]
    %723 = vrot.lane.b32.xlu0 %v717, 15
    %v724 = vpop.permute.xlu0 %723
    %725 = vrot.lane.b32.xlu0 %v718, 15
    %v726 = vpop.permute.xlu0 %725
    %727 = vrot.lane.b32.xlu0 %v719, 15
    %v728 = vpop.permute.xlu0 %727
    %v729 = vsel %vm186, %v724, %v726
    %v730 = vsel %vm186, %v726, %v728
    %v733 = vsel %vm175, %v729, 0.0
    %v734 = vsel %vm176, %v730, 0.0
    %735 = vst [vmem:[#allocation3 + $0x50] sm:$0xff] %v733
    %736 = vst [vmem:[#allocation3 + $0x58] sm:$0xff] %v734
    %v737 = vld [vmem:[#allocation2] sm:$0xff]
    %v738 = vld [vmem:[#allocation2 + $0x8] sm:$0xff]
    %v739 = vld [vmem:[#allocation2 + $0x10] sm:$0xff]
    %743 = vrot.lane.b32.xlu0 %v737, 1
    %v744 = vpop.permute.xlu0 %743
    %745 = vrot.lane.b32.xlu0 %v738, 1
    %v746 = vpop.permute.xlu0 %745
    %747 = vrot.lane.b32.xlu0 %v739, 1
    %v748 = vpop.permute.xlu0 %747
    %v749 = vsel %vm227, %v744, %v746
    %v750 = vsel %vm227, %v746, %v748
    %v753 = vsel %vm93, %v749, 0.0
    %v754 = vsel %vm94, %v750, 0.0
    %755 = vst [vmem:[#allocation3 + $0x60] sm:$0xff] %v753
    %756 = vst [vmem:[#allocation3 + $0x68] sm:$0xff] %v754
    %v757 = vld [vmem:[%s68] sm:$0xff]
    %v758 = vld [vmem:[%s68 + $0x8] sm:$0xff]
    %v759 = vld [vmem:[%s68 + $0x10] sm:$0xff]
    %763 = vrot.lane.b32.xlu0 %v757, 1
    %v764 = vpop.permute.xlu0 %763
    %765 = vrot.lane.b32.xlu0 %v758, 1
    %v766 = vpop.permute.xlu0 %765
    %767 = vrot.lane.b32.xlu0 %v759, 1
    %v768 = vpop.permute.xlu0 %767
    %v769 = vsel %vm227, %v764, %v766
    %v770 = vsel %vm227, %v766, %v768
    %v773 = vsel %vm93, %v769, 0.0
    %v774 = vsel %vm94, %v770, 0.0
    %775 = vst [vmem:[#allocation3 + $0x70] sm:$0xff] %v773
    %776 = vst [vmem:[#allocation3 + $0x78] sm:$0xff] %v774
    %v777 = vld [vmem:[#allocation2 + $0x8] sm:$0xff]
    %v778 = vld [vmem:[#allocation2 + $0x10] sm:$0xff]
    %779 = vst [vmem:[#allocation3 + $0x80] sm:$0xff] %v777
    %780 = vst [vmem:[#allocation3 + $0x88] sm:$0xff] %v778
    %v781 = vld [vmem:[%s68 + $0x8] sm:$0xff]
    %v782 = vld [vmem:[%s68 + $0x10] sm:$0xff]
    %783 = vst [vmem:[#allocation3 + $0x90] sm:$0xff] %v781
    %784 = vst [vmem:[#allocation3 + $0x98] sm:$0xff] %v782
    %v785 = vld [vmem:[#allocation2 + $0x8] sm:$0xff]
    %v786 = vld [vmem:[#allocation2 + $0x10] sm:$0xff]
    %v787 = vld [vmem:[#allocation2 + $0x18] sm:$0xff]
    %791 = vrot.lane.b32.xlu0 %v785, 127
    %v792 = vpop.permute.xlu0 %791
    %793 = vrot.lane.b32.xlu0 %v786, 127
    %v794 = vpop.permute.xlu0 %793
    %795 = vrot.lane.b32.xlu0 %v787, 127
    %v796 = vpop.permute.xlu0 %795
    %v797 = vsel %vm276, %v792, %v794
    %v798 = vsel %vm276, %v794, %v796
    %v801 = vsel %vm175, %v797, 0.0
    %v802 = vsel %vm176, %v798, 0.0
    %803 = vst [vmem:[#allocation3 + $0xa0] sm:$0xff] %v801
    %804 = vst [vmem:[#allocation3 + $0xa8] sm:$0xff] %v802
    %v805 = vld [vmem:[%s68 + $0x8] sm:$0xff]
    %v806 = vld [vmem:[%s68 + $0x10] sm:$0xff]
    %v807 = vld [vmem:[%s68 + $0x18] sm:$0xff]
    %811 = vrot.lane.b32.xlu0 %v805, 127
    %v812 = vpop.permute.xlu0 %811
    %813 = vrot.lane.b32.xlu0 %v806, 127
    %v814 = vpop.permute.xlu0 %813
    %815 = vrot.lane.b32.xlu0 %v807, 127
    %v816 = vpop.permute.xlu0 %815
    %v817 = vsel %vm276, %v812, %v814
    %v818 = vsel %vm276, %v814, %v816
    %v821 = vsel %vm175, %v817, 0.0
    %v822 = vsel %vm176, %v818, 0.0
    %823 = vst [vmem:[#allocation3 + $0xb0] sm:$0xff] %v821
    %824 = vst [vmem:[#allocation3 + $0xb8] sm:$0xff] %v822
    %v825 = vld [vmem:[#allocation2 + $0x8] sm:$0xff]
    %v826 = vld [vmem:[#allocation2 + $0x10] sm:$0xff]
    %v827 = vld [vmem:[#allocation2 + $0x18] sm:$0xff]
    %831 = vrot.lane.b32.xlu0 %v825, 113
    %v832 = vpop.permute.xlu0 %831
    %833 = vrot.lane.b32.xlu0 %v826, 113
    %v834 = vpop.permute.xlu0 %833
    %835 = vrot.lane.b32.xlu0 %v827, 113
    %v836 = vpop.permute.xlu0 %835
    %v837 = vsel %vm317, %v832, %v834
    %v838 = vsel %vm317, %v834, %v836
    %v841 = vsel %vm93, %v837, 0.0
    %v842 = vsel %vm94, %v838, 0.0
    %843 = vst [vmem:[#allocation3 + $0xc0] sm:$0xff] %v841
    %844 = vst [vmem:[#allocation3 + $0xc8] sm:$0xff] %v842
    %v845 = vld [vmem:[%s68 + $0x8] sm:$0xff]
    %v846 = vld [vmem:[%s68 + $0x10] sm:$0xff]
    %v847 = vld [vmem:[%s68 + $0x18] sm:$0xff]
    %851 = vrot.lane.b32.xlu0 %v845, 113
    %v852 = vpop.permute.xlu0 %851
    %853 = vrot.lane.b32.xlu0 %v846, 113
    %v854 = vpop.permute.xlu0 %853
    %855 = vrot.lane.b32.xlu0 %v847, 113
    %v856 = vpop.permute.xlu0 %855
    %v857 = vsel %vm317, %v852, %v854
    %v858 = vsel %vm317, %v854, %v856
    %v861 = vsel %vm93, %v857, 0.0
    %v862 = vsel %vm94, %v858, 0.0
    %863 = vst [vmem:[#allocation3 + $0xd0] sm:$0xff] %v861
    %864 = vst [vmem:[#allocation3 + $0xd8] sm:$0xff] %v862
    %v865 = vld [vmem:[#allocation2 + $0x8] sm:$0xff]
    %v866 = vld [vmem:[#allocation2 + $0x10] sm:$0xff]
    %v867 = vld [vmem:[#allocation2 + $0x18] sm:$0xff]
    %871 = vrot.lane.b32.xlu0 %v865, 112
    %v872 = vpop.permute.xlu0 %871
    %873 = vrot.lane.b32.xlu0 %v866, 112
    %v874 = vpop.permute.xlu0 %873
    %875 = vrot.lane.b32.xlu0 %v867, 112
    %v876 = vpop.permute.xlu0 %875
    %v877 = vsel %vm358, %v872, %v874
    %v878 = vsel %vm358, %v874, %v876
    %881 = vst [vmem:[#allocation3 + $0xe0] sm:$0xff] %v877
    %882 = vst [vmem:[#allocation3 + $0xe8] sm:$0xff] %v878
    %v883 = vld [vmem:[%s68 + $0x8] sm:$0xff]
    %v884 = vld [vmem:[%s68 + $0x10] sm:$0xff]
    %v885 = vld [vmem:[%s68 + $0x18] sm:$0xff]
    %889 = vrot.lane.b32.xlu0 %v883, 112
    %v890 = vpop.permute.xlu0 %889
    %891 = vrot.lane.b32.xlu0 %v884, 112
    %v892 = vpop.permute.xlu0 %891
    %893 = vrot.lane.b32.xlu0 %v885, 112
    %v894 = vpop.permute.xlu0 %893
    %v895 = vsel %vm358, %v890, %v892
    %v896 = vsel %vm358, %v892, %v894
    %899 = vst [vmem:[#allocation3 + $0xf0] sm:$0xff] %v895
    %900 = vst [vmem:[#allocation3 + $0xf8] sm:$0xff] %v896
    %v901 = vld [vmem:[#allocation2 + $0x8] sm:$0xff]
    %v902 = vld [vmem:[#allocation2 + $0x10] sm:$0xff]
    %v903 = vld [vmem:[#allocation2 + $0x18] sm:$0xff]
    %907 = vrot.lane.b32.xlu0 %v901, 111
    %v908 = vpop.permute.xlu0 %907
    %909 = vrot.lane.b32.xlu0 %v902, 111
    %v910 = vpop.permute.xlu0 %909
    %911 = vrot.lane.b32.xlu0 %v903, 111
    %v912 = vpop.permute.xlu0 %911
    %v913 = vsel %vm395, %v908, %v910
    %v914 = vsel %vm395, %v910, %v912
    %v917 = vsel %vm175, %v913, 0.0
    %v918 = vsel %vm176, %v914, 0.0
    %919 = vst [vmem:[#allocation3 + $0x100] sm:$0xff] %v917
    %920 = vst [vmem:[#allocation3 + $0x108] sm:$0xff] %v918
    %v921 = vld [vmem:[%s68 + $0x8] sm:$0xff]
    %v922 = vld [vmem:[%s68 + $0x10] sm:$0xff]
    %v923 = vld [vmem:[%s68 + $0x18] sm:$0xff]
    %927 = vrot.lane.b32.xlu0 %v921, 111
    %v928 = vpop.permute.xlu0 %927
    %929 = vrot.lane.b32.xlu0 %v922, 111
    %v930 = vpop.permute.xlu0 %929
    %931 = vrot.lane.b32.xlu0 %v923, 111
    %v932 = vpop.permute.xlu0 %931
    %v933 = vsel %vm395, %v928, %v930
    %v934 = vsel %vm395, %v930, %v932
    %v937 = vsel %vm175, %v933, 0.0
    %v938 = vsel %vm176, %v934, 0.0
    %939 = vst [vmem:[#allocation3 + $0x110] sm:$0xff] %v937
    %940 = vst [vmem:[#allocation3 + $0x118] sm:$0xff] %v938
    %v941 = vld [vmem:[%s3] sm:$0xf]
    %v942 = vld [vmem:[#allocation3] sm:$0xff]
    %v943 = vld [vmem:[#allocation3 + $0x8] sm:$0xff]
    %v944 = vld [vmem:[#allocation3 + $0x10] sm:$0xff]
    %v945 = vld [vmem:[#allocation3 + $0x18] sm:$0xff]
    %v946 = vld [vmem:[#allocation3 + $0x20] sm:$0xff]
    %v947 = vld [vmem:[#allocation3 + $0x28] sm:$0xff]
    %v948 = vld [vmem:[#allocation3 + $0x30] sm:$0xff]
    %v949 = vld [vmem:[#allocation3 + $0x38] sm:$0xff]
    %v950 = vld [vmem:[#allocation3 + $0x40] sm:$0xff]
    %v951 = vld [vmem:[#allocation3 + $0x48] sm:$0xff]
    %v952 = vld [vmem:[#allocation3 + $0x50] sm:$0xff]
    %v953 = vld [vmem:[#allocation3 + $0x58] sm:$0xff]
    %v954 = vld [vmem:[#allocation3 + $0x60] sm:$0xff]
    %v955 = vld [vmem:[#allocation3 + $0x68] sm:$0xff]
    %v956 = vld [vmem:[#allocation3 + $0x70] sm:$0xff]
    %v957 = vld [vmem:[#allocation3 + $0x78] sm:$0xff]
    %v958 = vld [vmem:[#allocation3 + $0x80] sm:$0xff]
    %v959 = vld [vmem:[#allocation3 + $0x88] sm:$0xff]
    %v960 = vld [vmem:[#allocation3 + $0x90] sm:$0xff]
    %v961 = vld [vmem:[#allocation3 + $0x98] sm:$0xff]
    %v962 = vld [vmem:[#allocation3 + $0xa0] sm:$0xff]
    %v963 = vld [vmem:[#allocation3 + $0xa8] sm:$0xff]
    %v964 = vld [vmem:[#allocation3 + $0xb0] sm:$0xff]
    %v965 = vld [vmem:[#allocation3 + $0xb8] sm:$0xff]
    %v966 = vld [vmem:[#allocation3 + $0xc0] sm:$0xff]
    %v967 = vld [vmem:[#allocation3 + $0xc8] sm:$0xff]
    %v968 = vld [vmem:[#allocation3 + $0xd0] sm:$0xff]
    %v969 = vld [vmem:[#allocation3 + $0xd8] sm:$0xff]
    %v970 = vld [vmem:[#allocation3 + $0xe0] sm:$0xff]
    %v971 = vld [vmem:[#allocation3 + $0xe8] sm:$0xff]
    %v972 = vld [vmem:[#allocation3 + $0xf0] sm:$0xff]
    %v973 = vld [vmem:[#allocation3 + $0xf8] sm:$0xff]
    %v974 = vld [vmem:[#allocation3 + $0x100] sm:$0xff]
    %v975 = vld [vmem:[#allocation3 + $0x108] sm:$0xff]
    %v976 = vld [vmem:[#allocation3 + $0x110] sm:$0xff]
    %v977 = vld [vmem:[#allocation3 + $0x118] sm:$0xff]
    %v978 = vld [vmem:[%s4] sm:$0xf]
    %980 = vset.pattern.permute.xlu0 0
    %981 = vperm.xlu0 %980, %v978
    %v982 = vpop.permute.xlu0 %981
    %v985 = vsel %vm467, %v941, 0
    %987 = vmatprep.subr.mxu0 0.0
    %988 = vmatpush1.msra.mxu0 0.0
    %989 = vmatprep.subr.mxu0 0.0
    %990 = vmatpush1.msra.mxu0 0.0
    %991 = vmatprep.subr.mxu0 0.0
    %992 = vmatpush1.msra.mxu0 0.0
    %993 = vmatprep.subr.mxu0 0.0
    %994 = vmatpush1.msra.mxu0 0.0
    %995 = vmatprep.subr.mxu0 0.0
    %996 = vmatpush1.msra.mxu0 0.0
    %997 = vmatprep.subr.mxu0 0.0
    %998 = vmatpush1.msra.mxu0 0.0
    %999 = vmatprep.subr.mxu0 0.0
    %1000 = vmatpush1.msra.mxu0 0.0
    %1001 = vmatprep.subr.mxu0 %v975
    %1002 = vmatpush1.msra.mxu0 %v974
    %1003 = vmatprep.subr.mxu0 %v971
    %1004 = vmatpush1.msra.mxu0 %v970
    %1005 = vmatprep.subr.mxu0 %v967
    %1006 = vmatpush1.msra.mxu0 %v966
    %1007 = vmatprep.subr.mxu0 %v963
    %1008 = vmatpush1.msra.mxu0 %v962
    %1009 = vmatprep.subr.mxu0 %v959
    %1010 = vmatpush1.msra.mxu0 %v958
    %1011 = vmatprep.subr.mxu0 %v955
    %1012 = vmatpush1.msra.mxu0 %v954
    %1013 = vmatprep.subr.mxu0 %v951
    %1014 = vmatpush1.msra.mxu0 %v950
    %1015 = vmatprep.subr.mxu0 %v947
    %1016 = vmatpush1.msra.mxu0 %v946
    %1017 = vmatprep.subr.mxu0 %v943
    %1018 = vmatpush1.msra.mxu0 %v942
    %1019 = vmatprep.subr.mxu0 0.0
    %1020 = vmatpush2.msra.mxu0 0.0
    %1021 = vmatprep.subr.mxu0 0.0
    %1022 = vmatpush2.msra.mxu0 0.0
    %1023 = vmatprep.subr.mxu0 0.0
    %1024 = vmatpush2.msra.mxu0 0.0
    %1025 = vmatprep.subr.mxu0 0.0
    %1026 = vmatpush2.msra.mxu0 0.0
    %1027 = vmatprep.subr.mxu0 0.0
    %1028 = vmatpush2.msra.mxu0 0.0
    %1029 = vmatprep.subr.mxu0 0.0
    %1030 = vmatpush2.msra.mxu0 0.0
    %1031 = vmatprep.subr.mxu0 0.0
    %1032 = vmatpush2.msra.mxu0 0.0
    %1033 = vmatprep.subr.mxu0 0.0
    %1034 = vmatpush2.msra.mxu0 0.0
    %1035 = vmatprep.subr.mxu0 0.0
    %1036 = vmatpush2.msra.mxu0 0.0
    %1037 = vmatprep.subr.mxu0 0.0
    %1038 = vmatpush2.msra.mxu0 0.0
    %1039 = vmatprep.subr.mxu0 0.0
    %1040 = vmatpush2.msra.mxu0 0.0
    %1041 = vmatprep.subr.mxu0 0.0
    %1042 = vmatpush2.msra.mxu0 0.0
    %1043 = vmatprep.subr.mxu0 0.0
    %1044 = vmatpush2.msra.mxu0 0.0
    %1045 = vmatprep.subr.mxu0 0.0
    %1046 = vmatpush2.msra.mxu0 0.0
    %1047 = vmatprep.subr.mxu0 0.0
    %1048 = vmatpush2.msra.mxu0 0.0
    %1049 = vmatprep.subr.mxu0 0.0
    %1050 = vmatpush2.msra.mxu0 0.0
    %1051 = vmatprep.mubr.f32.mxu0 0.0
    %1052 = vmatmul.mubr.f32.gmra.mxu0 %v985
    %v1053 = vpop.f32.mrf.mxu0
    %v1054 = vadd.f32 %v982, %v1053
    %v1055 = vpop.f32.mrf.mxu0
    %v1056 = vadd.f32 %v982, %v1055
    %1057 = vdwg.mxu0
    %1058 = vmatprep.subr.mxu0 0.0
    %1059 = vmatpush1.msra.mxu0 0.0
    %1060 = vmatprep.subr.mxu0 0.0
    %1061 = vmatpush1.msra.mxu0 0.0
    %1062 = vmatprep.subr.mxu0 0.0
    %1063 = vmatpush1.msra.mxu0 0.0
    %1064 = vmatprep.subr.mxu0 0.0
    %1065 = vmatpush1.msra.mxu0 0.0
    %1066 = vmatprep.subr.mxu0 0.0
    %1067 = vmatpush1.msra.mxu0 0.0
    %1068 = vmatprep.subr.mxu0 0.0
    %1069 = vmatpush1.msra.mxu0 0.0
    %1070 = vmatprep.subr.mxu0 0.0
    %1071 = vmatpush1.msra.mxu0 0.0
    %1072 = vmatprep.subr.mxu0 %v977
    %1073 = vmatpush1.msra.mxu0 %v976
    %1074 = vmatprep.subr.mxu0 %v973
    %1075 = vmatpush1.msra.mxu0 %v972
    %1076 = vmatprep.subr.mxu0 %v969
    %1077 = vmatpush1.msra.mxu0 %v968
    %1078 = vmatprep.subr.mxu0 %v965
    %1079 = vmatpush1.msra.mxu0 %v964
    %1080 = vmatprep.subr.mxu0 %v961
    %1081 = vmatpush1.msra.mxu0 %v960
    %1082 = vmatprep.subr.mxu0 %v957
    %1083 = vmatpush1.msra.mxu0 %v956
    %1084 = vmatprep.subr.mxu0 %v953
    %1085 = vmatpush1.msra.mxu0 %v952
    %1086 = vmatprep.subr.mxu0 %v949
    %1087 = vmatpush1.msra.mxu0 %v948
    %1088 = vmatprep.subr.mxu0 %v945
    %1089 = vmatpush1.msra.mxu0 %v944
    %1090 = vmatprep.subr.mxu0 0.0
    %1091 = vmatpush2.msra.mxu0 0.0
    %1092 = vmatprep.subr.mxu0 0.0
    %1093 = vmatpush2.msra.mxu0 0.0
    %1094 = vmatprep.subr.mxu0 0.0
    %1095 = vmatpush2.msra.mxu0 0.0
    %1096 = vmatprep.subr.mxu0 0.0
    %1097 = vmatpush2.msra.mxu0 0.0
    %1098 = vmatprep.subr.mxu0 0.0
    %1099 = vmatpush2.msra.mxu0 0.0
    %1100 = vmatprep.subr.mxu0 0.0
    %1101 = vmatpush2.msra.mxu0 0.0
    %1102 = vmatprep.subr.mxu0 0.0
    %1103 = vmatpush2.msra.mxu0 0.0
    %1104 = vmatprep.subr.mxu0 0.0
    %1105 = vmatpush2.msra.mxu0 0.0
    %1106 = vmatprep.subr.mxu0 0.0
    %1107 = vmatpush2.msra.mxu0 0.0
    %1108 = vmatprep.subr.mxu0 0.0
    %1109 = vmatpush2.msra.mxu0 0.0
    %1110 = vmatprep.subr.mxu0 0.0
    %1111 = vmatpush2.msra.mxu0 0.0
    %1112 = vmatprep.subr.mxu0 0.0
    %1113 = vmatpush2.msra.mxu0 0.0
    %1114 = vmatprep.subr.mxu0 0.0
    %1115 = vmatpush2.msra.mxu0 0.0
    %1116 = vmatprep.subr.mxu0 0.0
    %1117 = vmatpush2.msra.mxu0 0.0
    %1118 = vmatprep.subr.mxu0 0.0
    %1119 = vmatpush2.msra.mxu0 0.0
    %1120 = vmatprep.subr.mxu0 0.0
    %1121 = vmatpush2.msra.mxu0 0.0
    %1122 = vmatprep.mubr.f32.mxu0 0.0
    %1123 = vmatmul.mubr.f32.gmra.mxu0 %v985
    %v1124 = vpop.f32.mrf.mxu0
    %v1125 = vadd.f32 %v982, %v1124
    %v1126 = vpop.f32.mrf.mxu0
    %v1127 = vadd.f32 %v982, %v1126
    %1128 = vdwg.mxu0
    %v1129 = vld [vmem:[#allocation4] sm:$0xff]
    %v1131 = vcombine.high %v1129, %v1129
    %v1133 = vadd.f32 %v1054, %v1129
    %v1134 = vadd.f32 %v1056, %v1131
    %v1135 = vmax.f32 %v1133, 0.0
    %v1136 = vmax.f32 %v1134, 0.0
    %v1139 = vcombine.low %v1135, %v1136
    %1141 = vst [vmem:[#allocation7] sm:$0xff] %v1139
    %v1142 = vld [vmem:[%s81] sm:$0xff]
    %v1144 = vcombine.high %v1142, %v1142
    %v1146 = vadd.f32 %v1125, %v1142
    %v1147 = vadd.f32 %v1127, %v1144
    %v1148 = vmax.f32 %v1146, 0.0
    %v1149 = vmax.f32 %v1147, 0.0
    %v1152 = vcombine.low %v1148, %v1149
    %s1154 = scalar_lea.vmem [#allocation7], 8
    %1155 = vst [vmem:[%s1154] sm:$0xff] %v1152
    // Predicated region
    $region26: #{tpu_custom_call.1} parent=1 // pred_check
      _
    $region27: #{tpu_custom_call.1} parent=1 // pred_check_branch
      %1157 = sbr.rel (0) target = $region29
    $region28: #{tpu_custom_call.1} parent=1 // pred_region
      %s1159 = ssub.s32 256, 256
      %1160 = vsyncadd [#allocation6], %s1159
      %s1161 = sshll.u32 [#allocation7], 4
      %s1162 = int_to_ptr.vmem [resolvable:$true] %s1161
      %1167 = dma.vmem_to_hbm [thread:$0]  %s1162, 256, %s5, [#allocation6], 128, 128, 8
    $region29: #{tpu_custom_call.1} parent=1 // pred_fallthru
      _
    // Predicated region
    $region30: #{tpu_custom_call.1} parent=1 // pred_check
      _
    $region31: #{tpu_custom_call.1} parent=1 // pred_check_branch
      %1169 = sbr.rel (0) target = $region33
    $region32: #{tpu_custom_call.1} parent=1 // pred_region
      %1170 = dma.done [#allocation6], 256
    $region33: #{tpu_custom_call.1} parent=1 // pred_fallthru
      _
    %1171 = vsyncpa [#allocation5], 1
    %1172 = vsyncpa [#allocation6], 1

</llo_original>
